<compile_context>
chip_gen: v5e
topology: v5e:2x2
jax: 0.10.0
libtpu: 0.0.40
codegen_flags: <defaults>
</compile_context>

<pallas_src>
import jax
import jax.numpy as jnp
from jax.experimental import pallas as pl
from jax.experimental.pallas import tpu as pltpu

NUM_ATOM_TYPE = 120
NUM_CHIRALITY_TAG = 3
NUM_BOND_TYPE = 6
NUM_BOND_DIRECTION = 3
BN_EPS = 1e-5


def round_up(x, m):
    return (x + m - 1) // m * m


def pad_last2(x, r, c):
    """Zero-pad the last two dims of x up to (r, c)."""
    pads = [(0, 0)] * (x.ndim - 2) + [(0, r - x.shape[-2]), (0, c - x.shape[-1])]
    return jnp.pad(x, pads)


# --------------------------------------------------------------------------
# Pallas kernel: one GIN layer per grid step; pool + head on the last step.
# --------------------------------------------------------------------------
def gnn_graphpred_kernel(x_emb_hbm,     # ANY  [Np, Dp]  f32   initial node embeddings
                         a_hbm,         # ANY  [Np, Np]  bf16  dense adjacency (tgt,src) + self loops
                         edge_sum_ref,  # [1, Np, Dp]  bf16  this layer's edge-embedding sums
                         w1t_ref,       # [1, Dp, Dp2] bf16
                         w2t_ref,       # [1, Dp2, Dp] bf16
                         bias_ref,      # [1, 8, Dp2]  f32   rows: b1, b2, gamma, beta, 0...
                         mask_ref,      # [1, Np]      f32   1/N in real node cols, 0 in padding
                         pool_ref,      # [G, Np]      f32   row-normalized mean-pool matrix
                         wp1t_ref,      # [Dp, Dp]     bf16
                         bp1_ref,       # [1, Dp]      f32
                         wp2t_ref,      # [Dp, Tp]     bf16
                         bp2_ref,       # [1, Tp]      f32
                         out_ref,       # [G, Tp]      f32
                         h_ref,         # VMEM scratch [Np, Dp] f32 (persists across layers)
                         a_vmem,        # VMEM scratch [Np, Np] bf16 (loaded once)
                         sems):         # DMA semaphores (2,)
    l = pl.program_id(0)
    last = pl.num_programs(0) - 1

    # One-time loads: initial node embeddings -> h scratch, adjacency -> VMEM.
    @pl.when(l == 0)
    def _():
        cp_h = pltpu.make_async_copy(x_emb_hbm, h_ref, sems.at[0])
        cp_a = pltpu.make_async_copy(a_hbm, a_vmem, sems.at[1])
        cp_h.start()
        cp_a.start()
        cp_h.wait()
        cp_a.wait()

    h = h_ref[...]

    # GIN 'add' aggregation: aggr[i] = sum_{e: tgt(e)=i} (h[src(e)] + edge_emb[e])
    aggr = jnp.dot(a_vmem[...], h.astype(jnp.bfloat16),
                   preferred_element_type=jnp.float32)
    aggr = aggr + edge_sum_ref[0].astype(jnp.float32)

    # Packed per-layer vectors: b1 (width Dp2), b2/gamma/beta (width Dp).
    bias = bias_ref[0]                       # [8, Dp2]
    dp = h.shape[1]
    b1 = bias[0:1, :]
    b2 = bias[1:2, 0:dp]
    gamma = bias[2:3, 0:dp]
    beta = bias[3:4, 0:dp]

    # GIN mlp: Linear(D, 2D) -> ReLU -> Linear(2D, D)  (bf16 operands, f32 accum)
    z = jnp.dot(aggr.astype(jnp.bfloat16), w1t_ref[0],
                preferred_element_type=jnp.float32) + b1
    z = jnp.maximum(z, 0.0)
    z = jnp.dot(z.astype(jnp.bfloat16), w2t_ref[0],
                preferred_element_type=jnp.float32) + b2

    # BatchNorm1d (training-mode batch statistics) via two tiny MXU passes.
    # mask_ref is pre-scaled by 1/N and zero in padded node rows, so padded rows
    # never pollute the statistics.
    mrow = mask_ref[...]                                             # [1, Np]
    mean = jnp.dot(mrow, z, preferred_element_type=jnp.float32)      # [1, Dp]
    ex2 = jnp.dot(mrow, z * z, preferred_element_type=jnp.float32)   # [1, Dp]
    var = jnp.maximum(ex2 - mean * mean, 0.0)                        # guard f32 cancellation
    scale = gamma * jax.lax.rsqrt(var + BN_EPS)
    shift = beta - mean * scale
    z = z * scale + shift

    # dropout(p=0) is identity; ReLU on every layer except the last (JK='last')
    @pl.when(l < last)
    def _():
        h_ref[...] = jnp.maximum(z, 0.0)

    @pl.when(l == last)
    def _():
        # global mean pool (pool rows already divided by per-graph node counts,
        # padded node columns are zero).  No redundant h store on the last step.
        g = jnp.dot(pool_ref[...], z, preferred_element_type=jnp.float32)
        # graph_pred_linear: Linear(D, D) -> ReLU -> Linear(D, num_tasks)
        g = jnp.dot(g.astype(jnp.bfloat16), wp1t_ref[...],
                    preferred_element_type=jnp.float32) + bp1_ref[...]
        g = jnp.maximum(g, 0.0)
        out_ref[...] = (jnp.dot(g.astype(jnp.bfloat16), wp2t_ref[...],
                                preferred_element_type=jnp.float32) + bp2_ref[...])


# --------------------------------------------------------------------------
# Deterministic parameter init (shapes follow the PyTorch module __init__)
# --------------------------------------------------------------------------
def xavier(key, shape):
    fan_in, fan_out = shape[-1], shape[-2]
    lim = jnp.sqrt(6.0 / (fan_in + fan_out))
    return jax.random.uniform(key, shape, jnp.float32, -lim, lim)


def init_params(key, num_layer, emb_dim, num_tasks):
    ks = iter(jax.random.split(key, 16 + 8 * num_layer))
    p = {}
    p["x_emb1"] = xavier(next(ks), (NUM_ATOM_TYPE, emb_dim))
    p["x_emb2"] = xavier(next(ks), (NUM_CHIRALITY_TAG, emb_dim))
    p["ee1"] = jnp.stack([xavier(next(ks), (NUM_BOND_TYPE, emb_dim))
                          for _ in range(num_layer)])
    p["ee2"] = jnp.stack([xavier(next(ks), (NUM_BOND_DIRECTION, emb_dim))
                          for _ in range(num_layer)])
    p["w1"] = jnp.stack([xavier(next(ks), (2 * emb_dim, emb_dim))
                         for _ in range(num_layer)])
    p["b1"] = jnp.zeros((num_layer, 2 * emb_dim), jnp.float32)
    p["w2"] = jnp.stack([xavier(next(ks), (emb_dim, 2 * emb_dim))
                         for _ in range(num_layer)])
    p["b2"] = jnp.zeros((num_layer, emb_dim), jnp.float32)
    p["gamma"] = jnp.ones((num_layer, emb_dim), jnp.float32)   # BN weight init
    p["beta"] = jnp.zeros((num_layer, emb_dim), jnp.float32)   # BN bias init
    p["wp1"] = xavier(next(ks), (emb_dim, emb_dim))
    p["bp1"] = 0.01 * jax.random.normal(next(ks), (emb_dim,), jnp.float32)
    p["wp2"] = xavier(next(ks), (num_tasks, emb_dim))
    p["bp2"] = 0.01 * jax.random.normal(next(ks), (num_tasks,), jnp.float32)
    return p


# --------------------------------------------------------------------------
# Plain-JAX glue: embedding lookups + dense graph operators, then pallas_call
# --------------------------------------------------------------------------
def gnn_graphpred_forward(params, x_nodes, edge_index, edge_attr, batch,
                          num_layer, emb_dim, num_tasks, num_graphs):
    N = x_nodes.shape[0]
    D = emb_dim
    G = num_graphs
    Np = round_up(max(N, 8), 128)        # node axis: sublane of h, K of A@h
    Dp = round_up(D, 128)                # embedding lane dim
    Dp2 = round_up(2 * D, 128)           # hidden lane dim of the GIN MLP
    Tp = round_up(num_tasks, 128)        # lane-dense output width

    # initial node embeddings (gather -> glue), zero-padded
    x_emb = params["x_emb1"][x_nodes[:, 0]] + params["x_emb2"][x_nodes[:, 1]]
    x_emb_p = pad_last2(x_emb, Np, Dp)

    # add self loops (self_loop_attr = [4, 0], as in GINConv.forward)
    loop = jnp.arange(N, dtype=edge_index.dtype)
    full_src = jnp.concatenate([edge_index[0], loop])
    full_tgt = jnp.concatenate([edge_index[1], loop])
    full_a0 = jnp.concatenate([edge_attr[:, 0], jnp.full((N,), 4, edge_attr.dtype)])
    full_a1 = jnp.concatenate([edge_attr[:, 1], jnp.zeros((N,), edge_attr.dtype)])

    # dense adjacency for the 'add' aggregation; bf16 is exact for small int counts
    A = jnp.zeros((Np, Np), jnp.float32).at[full_tgt, full_src].add(1.0)
    A = A.astype(jnp.bfloat16)

    # all layers' edge-embedding sums with ONE scatter: [L, Np, Dp] bf16
    e_all = params["ee1"][:, full_a0, :] + params["ee2"][:, full_a1, :]   # [L, E', D]
    edge_sum = jnp.zeros((num_layer, N, D), jnp.float32).at[:, full_tgt, :].add(e_all)
    edge_sum = pad_last2(edge_sum, Np, Dp).astype(jnp.bfloat16)

    # BN mask row: 1/N in real node positions, 0 in padding  -> stats via MXU
    mask_row = ((jnp.arange(Np) < N).astype(jnp.float32) / float(N))[None, :]

    # row-normalized mean-pool matrix [G, Np] (padded node columns are zero)
    onehot = (batch[None, :] == jnp.arange(G)[:, None]).astype(jnp.float32)
    counts = jnp.maximum(onehot.sum(axis=1, keepdims=True), 1.0)
    P = jnp.pad(onehot / counts, ((0, 0), (0, Np - N)))

    # kernel-friendly, lane-padded parameter layouts (MXU operands in bf16)
    w1t = pad_last2(jnp.transpose(params["w1"], (0, 2, 1)), Dp, Dp2).astype(jnp.bfloat16)
    w2t = pad_last2(jnp.transpose(params["w2"], (0, 2, 1)), Dp2, Dp).astype(jnp.bfloat16)

    # pack b1 / b2 / gamma / beta into ONE per-layer block [L, 8, Dp2]
    bias_pack = jnp.zeros((num_layer, 8, Dp2), jnp.float32)
    bias_pack = bias_pack.at[:, 0, :2 * D].set(params["b1"])
    bias_pack = bias_pack.at[:, 1, :D].set(params["b2"])
    bias_pack = bias_pack.at[:, 2, :D].set(params["gamma"])
    bias_pack = bias_pack.at[:, 3, :D].set(params["beta"])

    wp1t = pad_last2(params["wp1"].T, Dp, Dp).astype(jnp.bfloat16)
    wp2t = pad_last2(params["wp2"].T, Dp, Tp).astype(jnp.bfloat16)
    bp1 = pad_last2(params["bp1"][None, :], 1, Dp)
    bp2 = pad_last2(params["bp2"][None, :], 1, Tp)

    grid_spec = pltpu.PrefetchScalarGridSpec(
        num_scalar_prefetch=0,
        grid=(num_layer,),
        in_specs=[
            pl.BlockSpec(memory_space=pl.ANY),                # x_emb (DMA'd once -> h)
            pl.BlockSpec(memory_space=pl.ANY),                # A (DMA'd once -> a_vmem)
            pl.BlockSpec((1, Np, Dp), lambda l: (l, 0, 0)),   # edge_sum (per layer)
            pl.BlockSpec((1, Dp, Dp2), lambda l: (l, 0, 0)),  # w1t (per layer)
            pl.BlockSpec((1, Dp2, Dp), lambda l: (l, 0, 0)),  # w2t (per layer)
            pl.BlockSpec((1, 8, Dp2), lambda l: (l, 0, 0)),   # packed b1/b2/gamma/beta
            pl.BlockSpec((1, Np), lambda l: (0, 0)),          # BN mask row (resident)
            pl.BlockSpec((G, Np), lambda l: (0, 0)),          # pool (resident)
            pl.BlockSpec((Dp, Dp), lambda l: (0, 0)),         # wp1t (bf16)
            pl.BlockSpec((1, Dp), lambda l: (0, 0)),          # bp1
            pl.BlockSpec((Dp, Tp), lambda l: (0, 0)),         # wp2t (bf16)
            pl.BlockSpec((1, Tp), lambda l: (0, 0)),          # bp2
        ],
        out_specs=pl.BlockSpec((G, Tp), lambda l: (0, 0)),
        scratch_shapes=[
            pltpu.VMEM((Np, Dp), jnp.float32),     # h (persists across layers)
            pltpu.VMEM((Np, Np), jnp.bfloat16),    # A, single-buffered resident copy
            pltpu.SemaphoreType.DMA((2,)),
        ],
    )

    # VMEM budget: double-buffered per-layer streams + small residents + scratch.
    per_layer = 2 * (Np * Dp * 2 + Dp * Dp2 * 2 + Dp2 * Dp * 2 + 8 * Dp2 * 4)
    resident = 2 * (8 * Np * 4 + max(G, 8) * Np * 4 + Dp * Dp * 2 + Dp * Tp * 2
                    + 8 * (Dp + Tp) * 4 + max(G, 8) * Tp * 4)
    scratch = Np * Dp * 4 + Np * Np * 2 + 3 * Np * Dp2 * 4   # h + A copy + live temps
    needed = per_layer + resident + scratch
    try:
        vmem_cap = int(pltpu.get_tpu_info().vmem_capacity_bytes)
    except Exception:
        vmem_cap = 64 * 1024 * 1024        # conservative fallback (v7x-safe)
    vmem_limit = int(min(max(int(1.5 * needed), 32 * 1024 * 1024),
                         int(0.85 * vmem_cap)))

    flops = (num_layer * (2 * Np * Np * Dp + 2 * Np * Dp * Dp2 + 2 * Np * Dp2 * Dp
                          + 2 * 2 * Np * Dp)
             + 2 * G * Np * Dp + 2 * G * Dp * Dp + 2 * G * Dp * Tp)
    bytes_accessed = (x_emb_p.size * 4 + A.size * 2 + edge_sum.size * 2
                      + (w1t.size + w2t.size) * 2 + bias_pack.size * 4
                      + mask_row.size * 4 + P.size * 4
                      + (wp1t.size + wp2t.size) * 2 + (bp1.size + bp2.size) * 4
                      + G * Tp * 4)

    out_p = pl.pallas_call(
        gnn_graphpred_kernel,
        out_shape=jax.ShapeDtypeStruct((G, Tp), jnp.float32),
        grid_spec=grid_spec,
        compiler_params=pltpu.CompilerParams(
            dimension_semantics=("arbitrary",),      # layer axis is sequential (carried h)
            vmem_limit_bytes=vmem_limit),
        cost_estimate=pl.CostEstimate(flops=int(flops),
                                      transcendentals=int(num_layer * Dp),
                                      bytes_accessed=int(bytes_accessed)),
    )(x_emb_p, A, edge_sum, w1t, w2t, bias_pack, mask_row,
      P, wp1t, bp1, wp2t, bp2)

    return out_p[:, :num_tasks]


# pure-JAX f32 reference (same math as the PyTorch module) for a sanity check
def reference_forward(params, x_nodes, edge_index, edge_attr, batch,
                      num_layer, emb_dim, num_tasks, num_graphs):
    N = x_nodes.shape[0]
    x_emb = params["x_emb1"][x_nodes[:, 0]] + params["x_emb2"][x_nodes[:, 1]]
    loop = jnp.arange(N, dtype=edge_index.dtype)
    full_src = jnp.concatenate([edge_index[0], loop])
    full_tgt = jnp.concatenate([edge_index[1], loop])
    full_a0 = jnp.concatenate([edge_attr[:, 0], jnp.full((N,), 4, edge_attr.dtype)])
    full_a1 = jnp.concatenate([edge_attr[:, 1], jnp.zeros((N,), edge_attr.dtype)])
    h = x_emb
    for l in range(num_layer):
        e = params["ee1"][l][full_a0] + params["ee2"][l][full_a1]
        msg = h[full_src] + e
        aggr = jnp.zeros((N, emb_dim), jnp.float32).at[full_tgt].add(msg)
        z = jnp.maximum(aggr @ params["w1"][l].T + params["b1"][l], 0.0)
        z = z @ params["w2"][l].T + params["b2"][l]
        mean = z.mean(0, keepdims=True)
        var = ((z - mean) ** 2).mean(0, keepdims=True)
        z = (z - mean) / jnp.sqrt(var + BN_EPS) * params["gamma"][l] + params["beta"][l]
        if l < num_layer - 1:
            z = jnp.maximum(z, 0.0)
        h = z
    onehot = (batch[None, :] == jnp.arange(num_graphs)[:, None]).astype(jnp.float32)
    g = (onehot @ h) / jnp.maximum(onehot.sum(1, keepdims=True), 1.0)
    g = jnp.maximum(g @ params["wp1"].T + params["bp1"], 0.0)
    return g @ params["wp2"].T + params["bp2"]


if __name__ == "__main__":
    num_layer, emb_dim, num_tasks = 3, 32, 4
    N, E, G = 16, 32, 2

    key = jax.random.PRNGKey(0)
    kp, k1, k2, k3, k4, k5, k6 = jax.random.split(key, 7)

    params = init_params(kp, num_layer, emb_dim, num_tasks)

    x_nodes = jnp.stack(
        [jax.random.randint(k1, (N,), 0, NUM_ATOM_TYPE),
         jax.random.randint(k2, (N,), 0, NUM_CHIRALITY_TAG)], axis=1)      # [N, 2]
    edge_index = jnp.stack(
        [jax.random.randint(k3, (E,), 0, N),
         jax.random.randint(k4, (E,), 0, N)], axis=0)                      # [2, E]
    edge_attr = jnp.stack(
        [jax.random.randint(k5, (E,), 0, NUM_BOND_TYPE),
         jax.random.randint(k6, (E,), 0, NUM_BOND_DIRECTION)], axis=1)     # [E, 2]
    batch = jnp.repeat(jnp.arange(G, dtype=jnp.int32), N // G)             # [N]

    out = gnn_graphpred_forward(params, x_nodes, edge_index, edge_attr, batch,
                                num_layer, emb_dim, num_tasks, G)
    out = jax.block_until_ready(out)

    ref = reference_forward(params, x_nodes, edge_index, edge_attr, batch,
                            num_layer, emb_dim, num_tasks, G)
    assert out.shape == (G, num_tasks)
    # tolerance accounts for bf16 MXU operands (f32 accumulation) in the kernel
    assert jnp.allclose(out, ref, atol=5e-2, rtol=5e-2)

    print("KERNEL_OK")
</pallas_src>

<mosaic_0001>
module attributes {stable_mosaic.version = 11 : i64} {
  func.func @gnn_graphpred_kernel(%arg0: i32, %arg1: memref<128x128xf32, #tpu.memory_space<any>>, %arg2: memref<128x128xbf16, #tpu.memory_space<any>>, %arg3: memref<1x128x128xbf16, #tpu.memory_space<vmem>>, %arg4: memref<1x128x128xbf16, #tpu.memory_space<vmem>>, %arg5: memref<1x128x128xbf16, #tpu.memory_space<vmem>>, %arg6: memref<1x8x128xf32, #tpu.memory_space<vmem>>, %arg7: memref<1x128xf32, #tpu.memory_space<vmem>>, %arg8: memref<2x128xf32, #tpu.memory_space<vmem>>, %arg9: memref<128x128xbf16, #tpu.memory_space<vmem>>, %arg10: memref<1x128xf32, #tpu.memory_space<vmem>>, %arg11: memref<128x128xbf16, #tpu.memory_space<vmem>>, %arg12: memref<1x128xf32, #tpu.memory_space<vmem>>, %arg13: memref<2x128xf32, #tpu.memory_space<vmem>>, %arg14: memref<128x128xf32, #tpu.memory_space<vmem>>, %arg15: memref<128x128xbf16, #tpu.memory_space<vmem>>, %arg16: memref<2x!tpu.dma_semaphore, #tpu.memory_space<semaphore_mem>>) attributes {dimension_semantics = [#tpu.dimension_semantics<arbitrary>], iteration_bounds = array<i64: 3>, scalar_prefetch = 0 : i64, scratch_operands = 3 : i64, tpu.core_type = #tpu.core_type<tc>, window_params = [{}, {}, {transform_indices = @transform_2, window_bounds = array<i64: 1, 128, 128>}, {transform_indices = @transform_3, window_bounds = array<i64: 1, 128, 128>}, {transform_indices = @transform_4, window_bounds = array<i64: 1, 128, 128>}, {transform_indices = @transform_5, window_bounds = array<i64: 1, 8, 128>}, {pipeline_mode = #tpu.pipeline_mode<synchronous>, transform_indices = @transform_6, window_bounds = array<i64: 1, 128>}, {pipeline_mode = #tpu.pipeline_mode<synchronous>, transform_indices = @transform_7, window_bounds = array<i64: 2, 128>}, {pipeline_mode = #tpu.pipeline_mode<synchronous>, transform_indices = @transform_8, window_bounds = array<i64: 128, 128>}, {pipeline_mode = #tpu.pipeline_mode<synchronous>, transform_indices = @transform_9, window_bounds = array<i64: 1, 128>}, {pipeline_mode = #tpu.pipeline_mode<synchronous>, transform_indices = @transform_10, window_bounds = array<i64: 128, 128>}, {pipeline_mode = #tpu.pipeline_mode<synchronous>, transform_indices = @transform_11, window_bounds = array<i64: 1, 128>}, {pipeline_mode = #tpu.pipeline_mode<synchronous>, transform_indices = @transform_12, window_bounds = array<i64: 2, 128>}]} {
    %c0_i32 = arith.constant 0 : i32
    %0 = arith.cmpi eq, %arg0, %c0_i32 : i32
    %1 = arith.extui %0 : i1 to i32
    %c0_i32_0 = arith.constant 0 : i32
    %2 = arith.cmpi ne, %1, %c0_i32_0 : i32
    scf.if %2 {
      %c0_i32_28 = arith.constant 0 : i32
      %55 = tpu.memref_slice %arg16[%c0_i32_28] : memref<2x!tpu.dma_semaphore, #tpu.memory_space<semaphore_mem>> -> memref<1x!tpu.dma_semaphore, #tpu.memory_space<semaphore_mem>>
      %56 = tpu.memref_squeeze %55 : memref<1x!tpu.dma_semaphore, #tpu.memory_space<semaphore_mem>> -> memref<!tpu.dma_semaphore, #tpu.memory_space<semaphore_mem>>
      tpu.enqueue_dma source(%arg1 : memref<128x128xf32, #tpu.memory_space<any>>) target(%arg14 : memref<128x128xf32, #tpu.memory_space<vmem>>) target_semaphore(%56 : memref<!tpu.dma_semaphore, #tpu.memory_space<semaphore_mem>>)
      %c1_i32 = arith.constant 1 : i32
      %57 = tpu.memref_slice %arg16[%c1_i32] : memref<2x!tpu.dma_semaphore, #tpu.memory_space<semaphore_mem>> -> memref<1x!tpu.dma_semaphore, #tpu.memory_space<semaphore_mem>>
      %58 = tpu.memref_squeeze %57 : memref<1x!tpu.dma_semaphore, #tpu.memory_space<semaphore_mem>> -> memref<!tpu.dma_semaphore, #tpu.memory_space<semaphore_mem>>
      tpu.enqueue_dma source(%arg2 : memref<128x128xbf16, #tpu.memory_space<any>>) target(%arg15 : memref<128x128xbf16, #tpu.memory_space<vmem>>) target_semaphore(%58 : memref<!tpu.dma_semaphore, #tpu.memory_space<semaphore_mem>>)
      %c0_i32_29 = arith.constant 0 : i32
      %59 = tpu.memref_slice %arg16[%c0_i32_29] : memref<2x!tpu.dma_semaphore, #tpu.memory_space<semaphore_mem>> -> memref<1x!tpu.dma_semaphore, #tpu.memory_space<semaphore_mem>>
      %60 = tpu.memref_squeeze %59 : memref<1x!tpu.dma_semaphore, #tpu.memory_space<semaphore_mem>> -> memref<!tpu.dma_semaphore, #tpu.memory_space<semaphore_mem>>
      tpu.wait_dma2 semaphore(%60 : memref<!tpu.dma_semaphore, #tpu.memory_space<semaphore_mem>>) src(%arg1 : memref<128x128xf32, #tpu.memory_space<any>>) dst(%arg14 : memref<128x128xf32, #tpu.memory_space<vmem>>)
      %c1_i32_30 = arith.constant 1 : i32
      %61 = tpu.memref_slice %arg16[%c1_i32_30] : memref<2x!tpu.dma_semaphore, #tpu.memory_space<semaphore_mem>> -> memref<1x!tpu.dma_semaphore, #tpu.memory_space<semaphore_mem>>
      %62 = tpu.memref_squeeze %61 : memref<1x!tpu.dma_semaphore, #tpu.memory_space<semaphore_mem>> -> memref<!tpu.dma_semaphore, #tpu.memory_space<semaphore_mem>>
      tpu.wait_dma2 semaphore(%62 : memref<!tpu.dma_semaphore, #tpu.memory_space<semaphore_mem>>) src(%arg2 : memref<128x128xbf16, #tpu.memory_space<any>>) dst(%arg15 : memref<128x128xbf16, #tpu.memory_space<vmem>>)
    } else {
    }
    %c0 = arith.constant 0 : index
    %c0_1 = arith.constant 0 : index
    %3 = vector.load %arg14[%c0, %c0_1] : memref<128x128xf32, #tpu.memory_space<vmem>>, vector<128x128xf32>
    %c0_2 = arith.constant 0 : index
    %c0_3 = arith.constant 0 : index
    %4 = vector.load %arg15[%c0_2, %c0_3] : memref<128x128xbf16, #tpu.memory_space<vmem>>, vector<128x128xbf16>
    %5 = arith.truncf %3 : vector<128x128xf32> to vector<128x128xbf16>
    %cst = arith.constant dense<0.000000e+00> : vector<128x128xf32>
    %6 = tpu.matmul %4, %5, %cst {dimension_numbers = #tpu.dot_dimension_numbers<[1], [0], [0], [1], [0, 0, 1, 1], [], []>} : vector<128x128xbf16>, vector<128x128xbf16>, vector<128x128xf32> -> vector<128x128xf32>
    %c0_4 = arith.constant 0 : index
    %c0_5 = arith.constant 0 : index
    %c0_6 = arith.constant 0 : index
    %7 = vector.load %arg3[%c0_4, %c0_5, %c0_6] : memref<1x128x128xbf16, #tpu.memory_space<vmem>>, vector<1x128x128xbf16>
    %8 = vector.shape_cast %7 : vector<1x128x128xbf16> to vector<128x128xbf16>
    %9 = arith.extf %8 : vector<128x128xbf16> to vector<128x128xf32>
    %10 = arith.addf %6, %9 : vector<128x128xf32>
    %c0_7 = arith.constant 0 : index
    %c0_8 = arith.constant 0 : index
    %c0_9 = arith.constant 0 : index
    %11 = vector.load %arg6[%c0_7, %c0_8, %c0_9] : memref<1x8x128xf32, #tpu.memory_space<vmem>>, vector<1x8x128xf32>
    %12 = vector.shape_cast %11 : vector<1x8x128xf32> to vector<8x128xf32>
    %13 = vector.extract_strided_slice %12 {offsets = [0, 0], sizes = [1, 128], strides = [1, 1]} : vector<8x128xf32> to vector<1x128xf32>
    %14 = vector.extract_strided_slice %12 {offsets = [1, 0], sizes = [1, 128], strides = [1, 1]} : vector<8x128xf32> to vector<1x128xf32>
    %15 = vector.extract_strided_slice %12 {offsets = [2, 0], sizes = [1, 128], strides = [1, 1]} : vector<8x128xf32> to vector<1x128xf32>
    %16 = vector.extract_strided_slice %12 {offsets = [3, 0], sizes = [1, 128], strides = [1, 1]} : vector<8x128xf32> to vector<1x128xf32>
    %17 = arith.truncf %10 : vector<128x128xf32> to vector<128x128xbf16>
    %c0_10 = arith.constant 0 : index
    %c0_11 = arith.constant 0 : index
    %c0_12 = arith.constant 0 : index
    %18 = vector.load %arg4[%c0_10, %c0_11, %c0_12] : memref<1x128x128xbf16, #tpu.memory_space<vmem>>, vector<1x128x128xbf16>
    %19 = vector.shape_cast %18 : vector<1x128x128xbf16> to vector<128x128xbf16>
    %cst_13 = arith.constant dense<0.000000e+00> : vector<128x128xf32>
    %20 = tpu.matmul %17, %19, %cst_13 {dimension_numbers = #tpu.dot_dimension_numbers<[1], [0], [0], [1], [0, 0, 1, 1], [], []>} : vector<128x128xbf16>, vector<128x128xbf16>, vector<128x128xf32> -> vector<128x128xf32>
    %21 = vector.broadcast %13 : vector<1x128xf32> to vector<128x128xf32>
    %22 = arith.addf %20, %21 : vector<128x128xf32>
    %cst_14 = arith.constant 0.000000e+00 : f32
    %23 = vector.broadcast %cst_14 : f32 to vector<128x128xf32>
    %24 = arith.maximumf %22, %23 : vector<128x128xf32>
    %25 = arith.truncf %24 : vector<128x128xf32> to vector<128x128xbf16>
    %c0_15 = arith.constant 0 : index
    %c0_16 = arith.constant 0 : index
    %c0_17 = arith.constant 0 : index
    %26 = vector.load %arg5[%c0_15, %c0_16, %c0_17] : memref<1x128x128xbf16, #tpu.memory_space<vmem>>, vector<1x128x128xbf16>
    %27 = vector.shape_cast %26 : vector<1x128x128xbf16> to vector<128x128xbf16>
    %cst_18 = arith.constant dense<0.000000e+00> : vector<128x128xf32>
    %28 = tpu.matmul %25, %27, %cst_18 {dimension_numbers = #tpu.dot_dimension_numbers<[1], [0], [0], [1], [0, 0, 1, 1], [], []>} : vector<128x128xbf16>, vector<128x128xbf16>, vector<128x128xf32> -> vector<128x128xf32>
    %29 = vector.broadcast %14 : vector<1x128xf32> to vector<128x128xf32>
    %30 = arith.addf %28, %29 : vector<128x128xf32>
    %c0_19 = arith.constant 0 : index
    %c0_20 = arith.constant 0 : index
    %31 = vector.load %arg7[%c0_19, %c0_20] : memref<1x128xf32, #tpu.memory_space<vmem>>, vector<1x128xf32>
    %cst_21 = arith.constant dense<0.000000e+00> : vector<1x128xf32>
    %32 = tpu.matmul %31, %30, %cst_21 {dimension_numbers = #tpu.dot_dimension_numbers<[1], [0], [0], [1], [0, 0, 1, 1], [], []>} : vector<1x128xf32>, vector<128x128xf32>, vector<1x128xf32> -> vector<1x128xf32>
    %33 = arith.mulf %30, %30 : vector<128x128xf32>
    %cst_22 = arith.constant dense<0.000000e+00> : vector<1x128xf32>
    %34 = tpu.matmul %31, %33, %cst_22 {dimension_numbers = #tpu.dot_dimension_numbers<[1], [0], [0], [1], [0, 0, 1, 1], [], []>} : vector<1x128xf32>, vector<128x128xf32>, vector<1x128xf32> -> vector<1x128xf32>
    %35 = arith.mulf %32, %32 : vector<1x128xf32>
    %36 = arith.subf %34, %35 : vector<1x128xf32>
    %cst_23 = arith.constant 0.000000e+00 : f32
    %37 = vector.broadcast %cst_23 : f32 to vector<1x128xf32>
    %38 = arith.maximumf %36, %37 : vector<1x128xf32>
    %cst_24 = arith.constant 9.99999974E-6 : f32
    %39 = vector.broadcast %cst_24 : f32 to vector<1x128xf32>
    %40 = arith.addf %38, %39 : vector<1x128xf32>
    %41 = math.rsqrt %40 : vector<1x128xf32>
    %42 = arith.mulf %15, %41 : vector<1x128xf32>
    %43 = arith.mulf %32, %42 : vector<1x128xf32>
    %44 = arith.subf %16, %43 : vector<1x128xf32>
    %45 = vector.broadcast %42 : vector<1x128xf32> to vector<128x128xf32>
    %46 = arith.mulf %30, %45 : vector<128x128xf32>
    %47 = vector.broadcast %44 : vector<1x128xf32> to vector<128x128xf32>
    %48 = arith.addf %46, %47 : vector<128x128xf32>
    %c2_i32 = arith.constant 2 : i32
    %49 = arith.cmpi slt, %arg0, %c2_i32 : i32
    %50 = arith.extui %49 : i1 to i32
    %c0_i32_25 = arith.constant 0 : i32
    %51 = arith.cmpi ne, %50, %c0_i32_25 : i32
    scf.if %51 {
      %cst_28 = arith.constant 0.000000e+00 : f32
      %55 = vector.broadcast %cst_28 : f32 to vector<128x128xf32>
      %56 = arith.maximumf %48, %55 : vector<128x128xf32>
      %c0_29 = arith.constant 0 : index
      %c0_30 = arith.constant 0 : index
      %57 = vector.load %arg14[%c0_29, %c0_30] : memref<128x128xf32, #tpu.memory_space<vmem>>, vector<128x128xf32>
      tpu.vector_store %arg14[%c0_29, %c0_30], %56 {strides = array<i32>} : memref<128x128xf32, #tpu.memory_space<vmem>>, vector<128x128xf32>,
    } else {
    }
    %c2_i32_26 = arith.constant 2 : i32
    %52 = arith.cmpi eq, %arg0, %c2_i32_26 : i32
    %53 = arith.extui %52 : i1 to i32
    %c0_i32_27 = arith.constant 0 : i32
    %54 = arith.cmpi ne, %53, %c0_i32_27 : i32
    scf.if %54 {
      %c0_28 = arith.constant 0 : index
      %c0_29 = arith.constant 0 : index
      %55 = vector.load %arg8[%c0_28, %c0_29] : memref<2x128xf32, #tpu.memory_space<vmem>>, vector<2x128xf32>
      %cst_30 = arith.constant dense<0.000000e+00> : vector<2x128xf32>
      %56 = tpu.matmul %55, %48, %cst_30 {dimension_numbers = #tpu.dot_dimension_numbers<[1], [0], [0], [1], [0, 0, 1, 1], [], []>} : vector<2x128xf32>, vector<128x128xf32>, vector<2x128xf32> -> vector<2x128xf32>
      %57 = arith.truncf %56 : vector<2x128xf32> to vector<2x128xbf16>
      %c0_31 = arith.constant 0 : index
      %c0_32 = arith.constant 0 : index
      %58 = vector.load %arg9[%c0_31, %c0_32] : memref<128x128xbf16, #tpu.memory_space<vmem>>, vector<128x128xbf16>
      %cst_33 = arith.constant dense<0.000000e+00> : vector<2x128xf32>
      %59 = tpu.matmul %57, %58, %cst_33 {dimension_numbers = #tpu.dot_dimension_numbers<[1], [0], [0], [1], [0, 0, 1, 1], [], []>} : vector<2x128xbf16>, vector<128x128xbf16>, vector<2x128xf32> -> vector<2x128xf32>
      %c0_34 = arith.constant 0 : index
      %c0_35 = arith.constant 0 : index
      %60 = vector.load %arg10[%c0_34, %c0_35] : memref<1x128xf32, #tpu.memory_space<vmem>>, vector<1x128xf32>
      %61 = vector.broadcast %60 : vector<1x128xf32> to vector<2x128xf32>
      %62 = arith.addf %59, %61 : vector<2x128xf32>
      %cst_36 = arith.constant 0.000000e+00 : f32
      %63 = vector.broadcast %cst_36 : f32 to vector<2x128xf32>
      %64 = arith.maximumf %62, %63 : vector<2x128xf32>
      %65 = arith.truncf %64 : vector<2x128xf32> to vector<2x128xbf16>
      %c0_37 = arith.constant 0 : index
      %c0_38 = arith.constant 0 : index
      %66 = vector.load %arg11[%c0_37, %c0_38] : memref<128x128xbf16, #tpu.memory_space<vmem>>, vector<128x128xbf16>
      %cst_39 = arith.constant dense<0.000000e+00> : vector<2x128xf32>
      %67 = tpu.matmul %65, %66, %cst_39 {dimension_numbers = #tpu.dot_dimension_numbers<[1], [0], [0], [1], [0, 0, 1, 1], [], []>} : vector<2x128xbf16>, vector<128x128xbf16>, vector<2x128xf32> -> vector<2x128xf32>
      %c0_40 = arith.constant 0 : index
      %c0_41 = arith.constant 0 : index
      %68 = vector.load %arg12[%c0_40, %c0_41] : memref<1x128xf32, #tpu.memory_space<vmem>>, vector<1x128xf32>
      %69 = vector.broadcast %68 : vector<1x128xf32> to vector<2x128xf32>
      %70 = arith.addf %67, %69 : vector<2x128xf32>
      %c0_42 = arith.constant 0 : index
      %c0_43 = arith.constant 0 : index
      %71 = vector.load %arg13[%c0_42, %c0_43] : memref<2x128xf32, #tpu.memory_space<vmem>>, vector<2x128xf32>
      tpu.vector_store %arg13[%c0_42, %c0_43], %70 {strides = array<i32>} : memref<2x128xf32, #tpu.memory_space<vmem>>, vector<2x128xf32>,
    } else {
    }
    return
  }
  func.func @transform_2(%arg0: i32) -> (i32, i32, i32) {
    %c0_i32 = arith.constant 0 : i32
    %c0_i32_0 = arith.constant 0 : i32
    %c0_i32_1 = arith.constant 0 : i32
    return %arg0, %c0_i32, %c0_i32_0 : i32, i32, i32
  }
  func.func @transform_3(%arg0: i32) -> (i32, i32, i32) {
    %c0_i32 = arith.constant 0 : i32
    %c0_i32_0 = arith.constant 0 : i32
    %c0_i32_1 = arith.constant 0 : i32
    return %arg0, %c0_i32, %c0_i32_0 : i32, i32, i32
  }
  func.func @transform_4(%arg0: i32) -> (i32, i32, i32) {
    %c0_i32 = arith.constant 0 : i32
    %c0_i32_0 = arith.constant 0 : i32
    %c0_i32_1 = arith.constant 0 : i32
    return %arg0, %c0_i32, %c0_i32_0 : i32, i32, i32
  }
  func.func @transform_5(%arg0: i32) -> (i32, i32, i32) {
    %c0_i32 = arith.constant 0 : i32
    %c0_i32_0 = arith.constant 0 : i32
    %c0_i32_1 = arith.constant 0 : i32
    return %arg0, %c0_i32, %c0_i32_0 : i32, i32, i32
  }
  func.func @transform_6(%arg0: i32) -> (i32, i32) {
    %c0_i32 = arith.constant 0 : i32
    %c0_i32_0 = arith.constant 0 : i32
    %c0_i32_1 = arith.constant 0 : i32
    return %c0_i32, %c0_i32_0 : i32, i32
  }
  func.func @transform_7(%arg0: i32) -> (i32, i32) {
    %c0_i32 = arith.constant 0 : i32
    %c0_i32_0 = arith.constant 0 : i32
    %c0_i32_1 = arith.constant 0 : i32
    return %c0_i32, %c0_i32_0 : i32, i32
  }
  func.func @transform_8(%arg0: i32) -> (i32, i32) {
    %c0_i32 = arith.constant 0 : i32
    %c0_i32_0 = arith.constant 0 : i32
    %c0_i32_1 = arith.constant 0 : i32
    return %c0_i32, %c0_i32_0 : i32, i32
  }
  func.func @transform_9(%arg0: i32) -> (i32, i32) {
    %c0_i32 = arith.constant 0 : i32
    %c0_i32_0 = arith.constant 0 : i32
    %c0_i32_1 = arith.constant 0 : i32
    return %c0_i32, %c0_i32_0 : i32, i32
  }
  func.func @transform_10(%arg0: i32) -> (i32, i32) {
    %c0_i32 = arith.constant 0 : i32
    %c0_i32_0 = arith.constant 0 : i32
    %c0_i32_1 = arith.constant 0 : i32
    return %c0_i32, %c0_i32_0 : i32, i32
  }
  func.func @transform_11(%arg0: i32) -> (i32, i32) {
    %c0_i32 = arith.constant 0 : i32
    %c0_i32_0 = arith.constant 0 : i32
    %c0_i32_1 = arith.constant 0 : i32
    return %c0_i32, %c0_i32_0 : i32, i32
  }
  func.func @transform_12(%arg0: i32) -> (i32, i32) {
    %c0_i32 = arith.constant 0 : i32
    %c0_i32_0 = arith.constant 0 : i32
    %c0_i32_1 = arith.constant 0 : i32
    return %c0_i32, %c0_i32_0 : i32, i32
  }
}

</mosaic_0001>

<llo_original>
// kernel: tpu_custom_call.1
$region0: #{tpu_custom_call.1}
  #allocation0 [shape = 'u32[]', space=smem, size = 0x4, offset = 0x4, fixed_abs, tag = 'smem constant byte address 0x4 - core index']
  #allocation1 [shape = 'u32[72,128]{1,0:T(1,128)}', space=vmem, size = 0x9000, scoped, tag = 'internal scratch']
  #allocation2 [shape = 'f32[128,128]{1,0:T(8,128)}', space=vmem, size = 0x10000, scoped, tag = 'scratch operand']
  #allocation3 [shape = 'bf16[128,128]{1,0:T(8,128)(2,1)}', space=vmem, size = 0x8000, scoped, tag = 'scratch operand']
  #allocation4 [shape = 's32[2]{0}', space=sflag, size = 0x8, scoped, tag = 'scratch operand']
  #allocation17 [shape = 's32[]', space=sflag, size = 0x4, offset = 0, fixed_abs, tag = 'sflag constant byte address 0x0 - dummy sync flag']
  #allocation18 [shape = 's32[]', space=sflag, size = 0x4, offset = 0, fixed_abs, tag = 'sflag constant byte address 0x0 - dummy sync flag']
  #allocation19 [shape = 'u32[]', space=smem, size = 0x4, offset = 0x44, fixed_abs, tag = 'smem constant byte address 0x44 - assertion arg 0']
  #allocation20 [shape = 'u32[]', space=smem, size = 0x4, offset = 0x48, fixed_abs, tag = 'smem constant byte address 0x48 - assertion arg 1']
  #allocation21 [shape = 's32[]', space=sflag, size = 0x4, offset = 0, fixed_abs, tag = 'sflag constant byte address 0x0 - dummy sync flag']
  #allocation22 [shape = 's32[]', space=sflag, size = 0x4, offset = 0, fixed_abs, tag = 'sflag constant byte address 0x0 - dummy sync flag']
  %s0 = inlined_call_operand.hbm [shape: f32[128,128], index: 0, kind: input, shape index: {}]
  %s1 = inlined_call_operand.hbm [shape: bf16[128,128], index: 1, kind: input, shape index: {}]
  %s2 = inlined_call_operand.hbm [shape: bf16[3,128,128], index: 2, kind: input, shape index: {}]
  %s3 = inlined_call_operand.hbm [shape: bf16[3,128,128], index: 3, kind: input, shape index: {}]
  %s4 = inlined_call_operand.hbm [shape: bf16[3,128,128], index: 4, kind: input, shape index: {}]
  %s5 = inlined_call_operand.hbm [shape: f32[3,8,128], index: 5, kind: input, shape index: {}]
  %s6 = inlined_call_operand.vmem [shape: f32[1,128], index: 6, kind: input, shape index: {}]
  %s7 = inlined_call_operand.vmem [shape: f32[2,128], index: 7, kind: input, shape index: {}]
  %s8 = inlined_call_operand.hbm [shape: bf16[128,128], index: 8, kind: input, shape index: {}]
  %s9 = inlined_call_operand.vmem [shape: f32[1,128], index: 9, kind: input, shape index: {}]
  %s10 = inlined_call_operand.hbm [shape: bf16[128,128], index: 10, kind: input, shape index: {}]
  %s11 = inlined_call_operand.vmem [shape: f32[1,128], index: 11, kind: input, shape index: {}]
  %s12 = inlined_call_operand.hbm [shape: f32[2,128], index: 12, kind: output, shape index: {}]
  %s13 = sld [smem:[#allocation0]]
  $region117: #{tpu_custom_call.1} parent=0
    _
  %s15 = ssub.s32 1, %s13
  %s16 = scalar_select 0, %s15, %s13
  $region1: #{tpu_custom_call.1} parent=0
    #allocation5 [shape = 'u8[65536]{0}', space=vmem, size = 0x10000, scoped, tag = 'input window, operand 2']
    #allocation6 [shape = 's32[2]{0}', space=sflag, size = 0x8, scoped, tag = 'scoped memory for tpu_custom_call.1']
    #allocation7 [shape = 's32[2]{0}', space=sflag, size = 0x8, scoped, tag = 'scoped memory for tpu_custom_call.1']
    #allocation8 [shape = 'u8[65536]{0}', space=vmem, size = 0x10000, scoped, tag = 'input window, operand 3']
    #allocation9 [shape = 's32[2]{0}', space=sflag, size = 0x8, scoped, tag = 'scoped memory for tpu_custom_call.1']
    #allocation10 [shape = 'u8[65536]{0}', space=vmem, size = 0x10000, scoped, tag = 'input window, operand 4']
    #allocation11 [shape = 'u8[8192]{0}', space=vmem, size = 0x2000, scoped, tag = 'input window, operand 5']
    #allocation12 [shape = 's32[2]{0}', space=sflag, size = 0x8, scoped, tag = 'scoped memory for tpu_custom_call.1']
    #allocation13 [shape = 'u8[32768]{0}', space=vmem, size = 0x8000, scoped, tag = 'input window, operand 8, single buffered']
    #allocation14 [shape = 'u8[32768]{0}', space=vmem, size = 0x8000, scoped, tag = 'input window, operand 10, single buffered']
    #allocation15 [shape = 's32[1]{0}', space=sflag, size = 0x4, scoped, tag = 'scoped memory for tpu_custom_call.1']
    #allocation16 [shape = 'u8[1024]{0}', space=vmem, size = 0x400, scoped, tag = 'output window, operand 0, single buffered']
    %17 = vsyncpa [#allocation6], 0
    %s18 = scalar_lea.sflag [#allocation6], 1
    %19 = vsyncpa %s18, 0
    %20 = vsyncpa [#allocation9], 0
    %s21 = scalar_lea.sflag [#allocation9], 1
    %22 = vsyncpa %s21, 0
    %23 = vsyncpa [#allocation12], 0
    %s24 = scalar_lea.sflag [#allocation12], 1
    %25 = vsyncpa %s24, 0
    %26 = vsyncpa [#allocation15], 0
    %27 = vsyncpa [#allocation7], 0
    loop: start=0, step=1, limit=5
    $region2: #{tpu_custom_call.1} parent=1 // loop_pre_header
      _
    $region3: #{tpu_custom_call.1} parent=1 // loop_header
      %s29 = sphi 0, %s33
      %p30 = scmp.ge.s32.totalorder %s29, 5
      %s39 = sphi 0, %s41
      %s42 = sphi 0, %s39
      %s43 = sphi 0, %s42
      %s59 = sphi 0, %s43
      %s65 = sphi 0, %s67
      %s68 = sphi 0, %s65
      %s69 = sphi 0, %s68
      %s85 = sphi 0, %s69
      %s91 = sphi 0, %s93
      %s94 = sphi 0, %s91
      %s95 = sphi 0, %s94
      %s111 = sphi 0, %s95
      %s117 = sphi 0, %s119
      %s120 = sphi 0, %s117
      %s121 = sphi 0, %s120
      %s137 = sphi 0, %s121
      %s141 = sphi 0, %s141
      %s143 = sphi 0, %s141
      %s144 = sphi 0, %s143
      %s158 = sphi 0, %s144
      %s162 = sphi 0, %s162
      %s164 = sphi 0, %s162
      %s165 = sphi 0, %s164
      %s179 = sphi 0, %s165
      %s183 = sphi 0, %s183
      %s185 = sphi 0, %s183
      %s186 = sphi 0, %s185
      %s200 = sphi 0, %s186
      %s204 = sphi 0, %s204
      %s206 = sphi 0, %s204
      %s207 = sphi 0, %s206
      %s221 = sphi 0, %s207
      %s225 = sphi 0, %s225
      %s227 = sphi 0, %s225
      %s228 = sphi 0, %s227
      %s242 = sphi 0, %s228
      %s246 = sphi 0, %s246
      %s248 = sphi 0, %s246
      %s249 = sphi 0, %s248
      %s263 = sphi 0, %s249
      %s267 = sphi 0, %s267
      %s269 = sphi 0, %s267
      %s270 = sphi 0, %s269
      %s284 = sphi 0, %s270
    $region4: #{tpu_custom_call.1} parent=1 // loop_header_branch
      %32 = sbr.rel (%p30) target = $region8
    $region5: #{tpu_custom_call.1} parent=1 // loop_body
      %s34 = ssub.s32 %s29, 1
      %s35 = ssub.s32 %s29, 2
      %s36 = sadd.s32 %s29, 1
      %s37 = ssub.s32 %s29, %s36
      %p38 = scmp.eq.s32.totalorder %s37, 0
      %s40 = sadd.s32 %s39, 1
      %s41 = scalar_select %p38, %s39, %s40
      %p44 = pneg %p38
      %p45 = scmp.eq.s32.totalorder %s29, 2
      %p46 = por %p44, %p45
      %p47 = scmp.ne.s32.totalorder %s39, %s42
      %p48 = scmp.eq.s32.totalorder %s29, 0
      %p49 = por %p47, %p48
      %p50 = scmp.ne.s32.totalorder %s39, %s42
      %p51 = scmp.eq.s32.totalorder %s34, 2
      %p52 = por %p50, %p51
      %p53 = scmp.ne.s32.totalorder %s42, %s43
      %p54 = scmp.eq.s32.totalorder %s34, 0
      %p55 = por %p53, %p54
      %p56 = scmp.ne.s32.totalorder %s42, %s43
      %p57 = scmp.eq.s32.totalorder %s35, 2
      %p58 = por %p56, %p57
      %p60 = scmp.ne.s32.totalorder %s43, %s59
      %p61 = scmp.eq.s32.totalorder %s35, 0
      %p62 = por %p60, %p61
      %s63 = ssub.s32 %s29, %s36
      %p64 = scmp.eq.s32.totalorder %s63, 0
      %s66 = sadd.s32 %s65, 1
      %s67 = scalar_select %p64, %s65, %s66
      %p70 = pneg %p64
      %p71 = scmp.eq.s32.totalorder %s29, 2
      %p72 = por %p70, %p71
      %p73 = scmp.ne.s32.totalorder %s65, %s68
      %p74 = scmp.eq.s32.totalorder %s29, 0
      %p75 = por %p73, %p74
      %p76 = scmp.ne.s32.totalorder %s65, %s68
      %p77 = scmp.eq.s32.totalorder %s34, 2
      %p78 = por %p76, %p77
      %p79 = scmp.ne.s32.totalorder %s68, %s69
      %p80 = scmp.eq.s32.totalorder %s34, 0
      %p81 = por %p79, %p80
      %p82 = scmp.ne.s32.totalorder %s68, %s69
      %p83 = scmp.eq.s32.totalorder %s35, 2
      %p84 = por %p82, %p83
      %p86 = scmp.ne.s32.totalorder %s69, %s85
      %p87 = scmp.eq.s32.totalorder %s35, 0
      %p88 = por %p86, %p87
      %s89 = ssub.s32 %s29, %s36
      %p90 = scmp.eq.s32.totalorder %s89, 0
      %s92 = sadd.s32 %s91, 1
      %s93 = scalar_select %p90, %s91, %s92
      %p96 = pneg %p90
      %p97 = scmp.eq.s32.totalorder %s29, 2
      %p98 = por %p96, %p97
      %p99 = scmp.ne.s32.totalorder %s91, %s94
      %p100 = scmp.eq.s32.totalorder %s29, 0
      %p101 = por %p99, %p100
      %p102 = scmp.ne.s32.totalorder %s91, %s94
      %p103 = scmp.eq.s32.totalorder %s34, 2
      %p104 = por %p102, %p103
      %p105 = scmp.ne.s32.totalorder %s94, %s95
      %p106 = scmp.eq.s32.totalorder %s34, 0
      %p107 = por %p105, %p106
      %p108 = scmp.ne.s32.totalorder %s94, %s95
      %p109 = scmp.eq.s32.totalorder %s35, 2
      %p110 = por %p108, %p109
      %p112 = scmp.ne.s32.totalorder %s95, %s111
      %p113 = scmp.eq.s32.totalorder %s35, 0
      %p114 = por %p112, %p113
      %s115 = ssub.s32 %s29, %s36
      %p116 = scmp.eq.s32.totalorder %s115, 0
      %s118 = sadd.s32 %s117, 1
      %s119 = scalar_select %p116, %s117, %s118
      %p122 = pneg %p116
      %p123 = scmp.eq.s32.totalorder %s29, 2
      %p124 = por %p122, %p123
      %p125 = scmp.ne.s32.totalorder %s117, %s120
      %p126 = scmp.eq.s32.totalorder %s29, 0
      %p127 = por %p125, %p126
      %p128 = scmp.ne.s32.totalorder %s117, %s120
      %p129 = scmp.eq.s32.totalorder %s34, 2
      %p130 = por %p128, %p129
      %p131 = scmp.ne.s32.totalorder %s120, %s121
      %p132 = scmp.eq.s32.totalorder %s34, 0
      %p133 = por %p131, %p132
      %p134 = scmp.ne.s32.totalorder %s120, %s121
      %p135 = scmp.eq.s32.totalorder %s35, 2
      %p136 = por %p134, %p135
      %p138 = scmp.ne.s32.totalorder %s121, %s137
      %p139 = scmp.eq.s32.totalorder %s35, 0
      %p140 = por %p138, %p139
      %s142 = sadd.s32 %s141, 1
      %p145 = scmp.eq.s32.totalorder %s29, 2
      %p146 = scmp.ne.s32.totalorder %s141, %s143
      %p147 = scmp.eq.s32.totalorder %s29, 0
      %p148 = por %p146, %p147
      %p149 = scmp.ne.s32.totalorder %s141, %s143
      %p150 = scmp.eq.s32.totalorder %s34, 2
      %p151 = por %p149, %p150
      %p152 = scmp.ne.s32.totalorder %s143, %s144
      %p153 = scmp.eq.s32.totalorder %s34, 0
      %p154 = por %p152, %p153
      %p155 = scmp.ne.s32.totalorder %s143, %s144
      %p156 = scmp.eq.s32.totalorder %s35, 2
      %p157 = por %p155, %p156
      %p159 = scmp.ne.s32.totalorder %s144, %s158
      %p160 = scmp.eq.s32.totalorder %s35, 0
      %p161 = por %p159, %p160
      %s163 = sadd.s32 %s162, 1
      %p166 = scmp.eq.s32.totalorder %s29, 2
      %p167 = scmp.ne.s32.totalorder %s162, %s164
      %p168 = scmp.eq.s32.totalorder %s29, 0
      %p169 = por %p167, %p168
      %p170 = scmp.ne.s32.totalorder %s162, %s164
      %p171 = scmp.eq.s32.totalorder %s34, 2
      %p172 = por %p170, %p171
      %p173 = scmp.ne.s32.totalorder %s164, %s165
      %p174 = scmp.eq.s32.totalorder %s34, 0
      %p175 = por %p173, %p174
      %p176 = scmp.ne.s32.totalorder %s164, %s165
      %p177 = scmp.eq.s32.totalorder %s35, 2
      %p178 = por %p176, %p177
      %p180 = scmp.ne.s32.totalorder %s165, %s179
      %p181 = scmp.eq.s32.totalorder %s35, 0
      %p182 = por %p180, %p181
      %s184 = sadd.s32 %s183, 1
      %p187 = scmp.eq.s32.totalorder %s29, 2
      %p188 = scmp.ne.s32.totalorder %s183, %s185
      %p189 = scmp.eq.s32.totalorder %s29, 0
      %p190 = por %p188, %p189
      %p191 = scmp.ne.s32.totalorder %s183, %s185
      %p192 = scmp.eq.s32.totalorder %s34, 2
      %p193 = por %p191, %p192
      %p194 = scmp.ne.s32.totalorder %s185, %s186
      %p195 = scmp.eq.s32.totalorder %s34, 0
      %p196 = por %p194, %p195
      %p197 = scmp.ne.s32.totalorder %s185, %s186
      %p198 = scmp.eq.s32.totalorder %s35, 2
      %p199 = por %p197, %p198
      %p201 = scmp.ne.s32.totalorder %s186, %s200
      %p202 = scmp.eq.s32.totalorder %s35, 0
      %p203 = por %p201, %p202
      %s205 = sadd.s32 %s204, 1
      %p208 = scmp.eq.s32.totalorder %s29, 2
      %p209 = scmp.ne.s32.totalorder %s204, %s206
      %p210 = scmp.eq.s32.totalorder %s29, 0
      %p211 = por %p209, %p210
      %p212 = scmp.ne.s32.totalorder %s204, %s206
      %p213 = scmp.eq.s32.totalorder %s34, 2
      %p214 = por %p212, %p213
      %p215 = scmp.ne.s32.totalorder %s206, %s207
      %p216 = scmp.eq.s32.totalorder %s34, 0
      %p217 = por %p215, %p216
      %p218 = scmp.ne.s32.totalorder %s206, %s207
      %p219 = scmp.eq.s32.totalorder %s35, 2
      %p220 = por %p218, %p219
      %p222 = scmp.ne.s32.totalorder %s207, %s221
      %p223 = scmp.eq.s32.totalorder %s35, 0
      %p224 = por %p222, %p223
      %s226 = sadd.s32 %s225, 1
      %p229 = scmp.eq.s32.totalorder %s29, 2
      %p230 = scmp.ne.s32.totalorder %s225, %s227
      %p231 = scmp.eq.s32.totalorder %s29, 0
      %p232 = por %p230, %p231
      %p233 = scmp.ne.s32.totalorder %s225, %s227
      %p234 = scmp.eq.s32.totalorder %s34, 2
      %p235 = por %p233, %p234
      %p236 = scmp.ne.s32.totalorder %s227, %s228
      %p237 = scmp.eq.s32.totalorder %s34, 0
      %p238 = por %p236, %p237
      %p239 = scmp.ne.s32.totalorder %s227, %s228
      %p240 = scmp.eq.s32.totalorder %s35, 2
      %p241 = por %p239, %p240
      %p243 = scmp.ne.s32.totalorder %s228, %s242
      %p244 = scmp.eq.s32.totalorder %s35, 0
      %p245 = por %p243, %p244
      %s247 = sadd.s32 %s246, 1
      %p250 = scmp.eq.s32.totalorder %s29, 2
      %p251 = scmp.ne.s32.totalorder %s246, %s248
      %p252 = scmp.eq.s32.totalorder %s29, 0
      %p253 = por %p251, %p252
      %p254 = scmp.ne.s32.totalorder %s246, %s248
      %p255 = scmp.eq.s32.totalorder %s34, 2
      %p256 = por %p254, %p255
      %p257 = scmp.ne.s32.totalorder %s248, %s249
      %p258 = scmp.eq.s32.totalorder %s34, 0
      %p259 = por %p257, %p258
      %p260 = scmp.ne.s32.totalorder %s248, %s249
      %p261 = scmp.eq.s32.totalorder %s35, 2
      %p262 = por %p260, %p261
      %p264 = scmp.ne.s32.totalorder %s249, %s263
      %p265 = scmp.eq.s32.totalorder %s35, 0
      %p266 = por %p264, %p265
      %s268 = sadd.s32 %s267, 1
      %p271 = scmp.eq.s32.totalorder %s29, 2
      %p272 = scmp.ne.s32.totalorder %s267, %s269
      %p273 = scmp.eq.s32.totalorder %s29, 0
      %p274 = por %p272, %p273
      %p275 = scmp.ne.s32.totalorder %s267, %s269
      %p276 = scmp.eq.s32.totalorder %s34, 2
      %p277 = por %p275, %p276
      %p278 = scmp.ne.s32.totalorder %s269, %s270
      %p279 = scmp.eq.s32.totalorder %s34, 0
      %p280 = por %p278, %p279
      %p281 = scmp.ne.s32.totalorder %s269, %s270
      %p282 = scmp.eq.s32.totalorder %s35, 2
      %p283 = por %p281, %p282
      %p285 = scmp.ne.s32.totalorder %s270, %s284
      %p286 = scmp.eq.s32.totalorder %s35, 0
      %p287 = por %p285, %p286
      %p288 = scmp.le.s32.totalorder 1, %s29
      %p289 = scmp.lt.s32.totalorder %s29, 4
      %p290 = pnand %p288, %p289
      %p291 = pneg %p290
      // Predicated region
      $region9: #{tpu_custom_call.1} parent=5 // pred_check
        _
      $region10: #{tpu_custom_call.1} parent=5 // pred_check_branch
        %293 = sbr.rel (%p290) target = $region12
      $region11: #{tpu_custom_call.1} parent=5 // pred_region
        %s294 = ssub.s32 %s29, 1
        // Predicated region
        $region13: #{tpu_custom_call.1} parent=11 // pred_check
          %p295 = pneg %p154
        $region14: #{tpu_custom_call.1} parent=11 // pred_check_branch
          %297 = sbr.rel (%p295) target = $region16
        $region15: #{tpu_custom_call.1} parent=11 // pred_region
          _
        $region16: #{tpu_custom_call.1} parent=11 // pred_fallthru
          _
        // Predicated region
        $region17: #{tpu_custom_call.1} parent=11 // pred_check
          %p298 = pneg %p175
        $region18: #{tpu_custom_call.1} parent=11 // pred_check_branch
          %300 = sbr.rel (%p298) target = $region20
        $region19: #{tpu_custom_call.1} parent=11 // pred_region
          _
        $region20: #{tpu_custom_call.1} parent=11 // pred_fallthru
          _
        // Predicated region
        $region21: #{tpu_custom_call.1} parent=11 // pred_check
          %p301 = pneg %p196
        $region22: #{tpu_custom_call.1} parent=11 // pred_check_branch
          %303 = sbr.rel (%p301) target = $region24
        $region23: #{tpu_custom_call.1} parent=11 // pred_region
          %305 = vsyncadd [#allocation12], 0
          %s306 = sshll.u32 %s8, 4
          %s307 = int_to_ptr.hbm [resolvable:$true] %s306
          %s308 = sshll.u32 [#allocation13], 4
          %s309 = int_to_ptr.vmem [resolvable:$true] %s308
          %314 = dma.hbm_to_vmem [thread:$0]  %s307, 1024, %s309, [#allocation12], 64, 64, 4
        $region24: #{tpu_custom_call.1} parent=11 // pred_fallthru
          _
        // Predicated region
        $region25: #{tpu_custom_call.1} parent=11 // pred_check
          %p315 = pneg %p217
        $region26: #{tpu_custom_call.1} parent=11 // pred_check_branch
          %317 = sbr.rel (%p315) target = $region28
        $region27: #{tpu_custom_call.1} parent=11 // pred_region
          _
        $region28: #{tpu_custom_call.1} parent=11 // pred_fallthru
          _
        // Predicated region
        $region29: #{tpu_custom_call.1} parent=11 // pred_check
          %p318 = pneg %p238
        $region30: #{tpu_custom_call.1} parent=11 // pred_check_branch
          %320 = sbr.rel (%p318) target = $region32
        $region31: #{tpu_custom_call.1} parent=11 // pred_region
          %322 = vsyncadd [#allocation15], 0
          %s323 = sshll.u32 %s10, 4
          %s324 = int_to_ptr.hbm [resolvable:$true] %s323
          %s325 = sshll.u32 [#allocation14], 4
          %s326 = int_to_ptr.vmem [resolvable:$true] %s325
          %331 = dma.hbm_to_vmem [thread:$0]  %s324, 1024, %s326, [#allocation15], 64, 64, 4
        $region32: #{tpu_custom_call.1} parent=11 // pred_fallthru
          _
        // Predicated region
        $region33: #{tpu_custom_call.1} parent=11 // pred_check
          %p332 = pneg %p259
        $region34: #{tpu_custom_call.1} parent=11 // pred_check_branch
          %334 = sbr.rel (%p332) target = $region36
        $region35: #{tpu_custom_call.1} parent=11 // pred_region
          _
        $region36: #{tpu_custom_call.1} parent=11 // pred_fallthru
          _
      $region12: #{tpu_custom_call.1} parent=5 // pred_fallthru
        _
      %p335 = scmp.lt.s32.totalorder %s29, 3
      // Predicated region
      $region37: #{tpu_custom_call.1} parent=5 // pred_check
        %p336 = pneg %p335
      $region38: #{tpu_custom_call.1} parent=5 // pred_check_branch
        %338 = sbr.rel (%p336) target = $region40
      $region39: #{tpu_custom_call.1} parent=5 // pred_region
        // Predicated region
        $region41: #{tpu_custom_call.1} parent=39 // pred_check
          %p339 = pneg %p49
        $region42: #{tpu_custom_call.1} parent=39 // pred_check_branch
          %341 = sbr.rel (%p339) target = $region44
        $region43: #{tpu_custom_call.1} parent=39 // pred_region
          %s342 = sand.u32 %s39, 1
          %s343 = scalar_lea.sflag [#allocation6], %s342
          %s344 = sand.u32 %s39, 1
          %s345 = smul.addr %s344, 64
          %s346 = scalar_lea.vmem [#allocation5], %s345
          %348 = vsyncadd %s343, 0
          %s349 = smul.addr %s29, 16
          %s350 = smul.addr %s349, 4
          %s351 = scalar_lea.hbm %s2, %s350
          %s352 = sshll.u32 %s351, 4
          %s353 = int_to_ptr.hbm [resolvable:$true] %s352
          %s354 = sshll.u32 %s346, 4
          %s355 = int_to_ptr.vmem [resolvable:$true] %s354
          %360 = dma.hbm_to_vmem [thread:$0]  %s353, 1024, %s355, %s343, 64, 64, 4
        $region44: #{tpu_custom_call.1} parent=39 // pred_fallthru
          _
        // Predicated region
        $region45: #{tpu_custom_call.1} parent=39 // pred_check
          %p361 = pneg %p75
        $region46: #{tpu_custom_call.1} parent=39 // pred_check_branch
          %363 = sbr.rel (%p361) target = $region48
        $region47: #{tpu_custom_call.1} parent=39 // pred_region
          %s364 = sand.u32 %s29, 1
          %s365 = scalar_lea.sflag [#allocation9], %s364
          %s366 = sand.u32 %s65, 1
          %s367 = smul.addr %s366, 64
          %s368 = scalar_lea.vmem [#allocation8], %s367
          %370 = vsyncadd %s365, 0
          %s371 = smul.addr %s29, 16
          %s372 = smul.addr %s371, 4
          %s373 = scalar_lea.hbm %s3, %s372
          %s374 = sshll.u32 %s373, 4
          %s375 = int_to_ptr.hbm [resolvable:$true] %s374
          %s376 = sshll.u32 %s368, 4
          %s377 = int_to_ptr.vmem [resolvable:$true] %s376
          %382 = dma.hbm_to_vmem [thread:$0]  %s375, 1024, %s377, %s365, 64, 64, 4
        $region48: #{tpu_custom_call.1} parent=39 // pred_fallthru
          _
        // Predicated region
        $region49: #{tpu_custom_call.1} parent=39 // pred_check
          %p383 = pneg %p101
        $region50: #{tpu_custom_call.1} parent=39 // pred_check_branch
          %385 = sbr.rel (%p383) target = $region52
        $region51: #{tpu_custom_call.1} parent=39 // pred_region
          %s386 = sand.u32 %s29, 1
          %s387 = scalar_lea.sflag [#allocation9], %s386
          %s388 = sand.u32 %s91, 1
          %s389 = smul.addr %s388, 64
          %s390 = scalar_lea.vmem [#allocation10], %s389
          %392 = vsyncadd %s387, 0
          %s393 = smul.addr %s29, 16
          %s394 = smul.addr %s393, 4
          %s395 = scalar_lea.hbm %s4, %s394
          %s396 = sshll.u32 %s395, 4
          %s397 = int_to_ptr.hbm [resolvable:$true] %s396
          %s398 = sshll.u32 %s390, 4
          %s399 = int_to_ptr.vmem [resolvable:$true] %s398
          %404 = dma.hbm_to_vmem [thread:$0]  %s397, 1024, %s399, %s387, 64, 64, 4
        $region52: #{tpu_custom_call.1} parent=39 // pred_fallthru
          _
        // Predicated region
        $region53: #{tpu_custom_call.1} parent=39 // pred_check
          %p405 = pneg %p127
        $region54: #{tpu_custom_call.1} parent=39 // pred_check_branch
          %407 = sbr.rel (%p405) target = $region56
        $region55: #{tpu_custom_call.1} parent=39 // pred_region
          %s408 = sand.u32 %s29, 1
          %s409 = scalar_lea.sflag [#allocation12], %s408
          %s410 = sand.u32 %s117, 1
          %s411 = smul.addr %s410, 8
          %s412 = scalar_lea.vmem [#allocation11], %s411
          %414 = vsyncadd %s409, 0
          %s415 = smul.addr %s29, 8
          %s416 = scalar_lea.hbm %s5, %s415
          %s418 = sshll.u32 %s416, 4
          %s419 = int_to_ptr.hbm [resolvable:$true] %s418
          %s420 = sshll.u32 %s412, 4
          %s421 = int_to_ptr.vmem [resolvable:$true] %s420
          %423 = dma.hbm_to_vmem [thread:$0]  %s419, 128, %s421, %s409
        $region56: #{tpu_custom_call.1} parent=39 // pred_fallthru
          _
      $region40: #{tpu_custom_call.1} parent=5 // pred_fallthru
        _
      %p424 = scmp.le.s32.totalorder 1, %s29
      %p425 = scmp.lt.s32.totalorder %s29, 4
      %p426 = pnand %p424, %p425
      %p427 = pneg %p426
      // Predicated region
      $region57: #{tpu_custom_call.1} parent=5 // pred_check
        _
      $region58: #{tpu_custom_call.1} parent=5 // pred_check_branch
        %429 = sbr.rel (%p426) target = $region60
      $region59: #{tpu_custom_call.1} parent=5 // pred_region
        %s430 = ssub.s32 %s29, 1
        %s431 = sand.u32 %s42, 1
        %s432 = scalar_lea.sflag [#allocation6], %s431
        %s433 = sand.u32 %s42, 1
        %s434 = smul.addr %s433, 64
        %s435 = scalar_lea.vmem [#allocation5], %s434
        // Predicated region
        $region61: #{tpu_custom_call.1} parent=59 // pred_check
          %p436 = pneg %p55
        $region62: #{tpu_custom_call.1} parent=59 // pred_check_branch
          %438 = sbr.rel (%p436) target = $region64
        $region63: #{tpu_custom_call.1} parent=59 // pred_region
          %440 = dma.done %s432, 1024
        $region64: #{tpu_custom_call.1} parent=59 // pred_fallthru
          _
        %s441 = sand.u32 %s34, 1
        %s442 = scalar_lea.sflag [#allocation9], %s441
        %s443 = sand.u32 %s68, 1
        %s444 = smul.addr %s443, 64
        %s445 = scalar_lea.vmem [#allocation8], %s444
        // Predicated region
        $region65: #{tpu_custom_call.1} parent=59 // pred_check
          %p446 = pneg %p81
        $region66: #{tpu_custom_call.1} parent=59 // pred_check_branch
          %448 = sbr.rel (%p446) target = $region68
        $region67: #{tpu_custom_call.1} parent=59 // pred_region
          %450 = dma.done %s442, 1024
        $region68: #{tpu_custom_call.1} parent=59 // pred_fallthru
          _
        %s451 = sand.u32 %s34, 1
        %s452 = scalar_lea.sflag [#allocation9], %s451
        %s453 = sand.u32 %s94, 1
        %s454 = smul.addr %s453, 64
        %s455 = scalar_lea.vmem [#allocation10], %s454
        // Predicated region
        $region69: #{tpu_custom_call.1} parent=59 // pred_check
          %p456 = pneg %p107
        $region70: #{tpu_custom_call.1} parent=59 // pred_check_branch
          %458 = sbr.rel (%p456) target = $region72
        $region71: #{tpu_custom_call.1} parent=59 // pred_region
          %460 = dma.done %s452, 1024
        $region72: #{tpu_custom_call.1} parent=59 // pred_fallthru
          _
        %s461 = sand.u32 %s34, 1
        %s462 = scalar_lea.sflag [#allocation12], %s461
        %s463 = sand.u32 %s120, 1
        %s464 = smul.addr %s463, 8
        %s465 = scalar_lea.vmem [#allocation11], %s464
        // Predicated region
        $region73: #{tpu_custom_call.1} parent=59 // pred_check
          %p466 = pneg %p133
        $region74: #{tpu_custom_call.1} parent=59 // pred_check_branch
          %468 = sbr.rel (%p466) target = $region76
        $region75: #{tpu_custom_call.1} parent=59 // pred_region
          %470 = dma.done %s462, 128
        $region76: #{tpu_custom_call.1} parent=59 // pred_fallthru
          _
        // Predicated region
        $region77: #{tpu_custom_call.1} parent=59 // pred_check
          %p471 = pneg %p196
        $region78: #{tpu_custom_call.1} parent=59 // pred_check_branch
          %473 = sbr.rel (%p471) target = $region80
        $region79: #{tpu_custom_call.1} parent=59 // pred_region
          %475 = dma.done [#allocation12], 1024
        $region80: #{tpu_custom_call.1} parent=59 // pred_fallthru
          _
        // Predicated region
        $region81: #{tpu_custom_call.1} parent=59 // pred_check
          %p476 = pneg %p238
        $region82: #{tpu_custom_call.1} parent=59 // pred_check_branch
          %478 = sbr.rel (%p476) target = $region84
        $region83: #{tpu_custom_call.1} parent=59 // pred_region
          %480 = dma.done [#allocation15], 1024
        $region84: #{tpu_custom_call.1} parent=59 // pred_fallthru
          _
        %s481 = sand.u32 %s42, 1
        %s482 = scalar_lea.sflag [#allocation6], %s481
        %s483 = sand.u32 %s42, 1
        %s484 = smul.addr %s483, 64
        %s485 = scalar_lea.vmem [#allocation5], %s484
        %p486 = pneg %p55
        %p487 = pneg %p52
        %s488 = sand.u32 %s34, 1
        %s489 = scalar_lea.sflag [#allocation9], %s488
        %s490 = sand.u32 %s68, 1
        %s491 = smul.addr %s490, 64
        %s492 = scalar_lea.vmem [#allocation8], %s491
        %p493 = pneg %p81
        %p494 = pneg %p78
        %s495 = sand.u32 %s34, 1
        %s496 = scalar_lea.sflag [#allocation9], %s495
        %s497 = sand.u32 %s94, 1
        %s498 = smul.addr %s497, 64
        %s499 = scalar_lea.vmem [#allocation10], %s498
        %p500 = pneg %p107
        %p501 = pneg %p104
        %s502 = sand.u32 %s34, 1
        %s503 = scalar_lea.sflag [#allocation12], %s502
        %s504 = sand.u32 %s120, 1
        %s505 = smul.addr %s504, 8
        %s506 = scalar_lea.vmem [#allocation11], %s505
        %p507 = pneg %p133
        %p508 = pneg %p130
        %p509 = pneg %p154
        %p510 = pneg %p151
        %p511 = pneg %p175
        %p512 = pneg %p172
        %p513 = pneg %p196
        %p514 = pneg %p193
        %p515 = pneg %p217
        %p516 = pneg %p214
        %p517 = pneg %p238
        %p518 = pneg %p235
        %p519 = pneg %p259
        %p520 = pneg %p256
        %p521 = pneg %p280
        %p522 = pneg %p277
        %p523 = scmp.eq.s32.totalorder %s34, 0
        // Predicated region
        $region85: #{tpu_custom_call.1} parent=59 // pred_check
          %p524 = pneg %p523
        $region86: #{tpu_custom_call.1} parent=59 // pred_check_branch
          %526 = sbr.rel (%p524) target = $region88
        $region87: #{tpu_custom_call.1} parent=59 // pred_region
          // Predicated region
          $region89: #{tpu_custom_call.1} parent=87 // pred_check
            _
          $region90: #{tpu_custom_call.1} parent=87 // pred_check_branch
            %528 = sbr.rel target = $region92
          $region91: #{tpu_custom_call.1} parent=87 // pred_region
            %529 = sst [smem:[#allocation19]] [#allocation18]
            %530 = sst [smem:[#allocation20]] [#allocation17]
          $region92: #{tpu_custom_call.1} parent=87 // pred_fallthru
            _
          %532 = shalt.err (0)
          %s534 = sshll.u32 %s0, 4
          %s535 = int_to_ptr.hbm [resolvable:$true] %s534
          %s536 = sshll.u32 [#allocation2], 4
          %s537 = int_to_ptr.vmem [resolvable:$true] %s536
          %539 = dma.hbm_to_vmem [thread:$0]  %s535, 2048, %s537, [#allocation4]
          %s540 = scalar_lea.sflag [#allocation4], 1
          // Predicated region
          $region93: #{tpu_custom_call.1} parent=87 // pred_check
            _
          $region94: #{tpu_custom_call.1} parent=87 // pred_check_branch
            %542 = sbr.rel target = $region96
          $region95: #{tpu_custom_call.1} parent=87 // pred_region
            %543 = sst [smem:[#allocation19]] [#allocation22]
            %544 = sst [smem:[#allocation20]] [#allocation21]
          $region96: #{tpu_custom_call.1} parent=87 // pred_fallthru
            _
          %546 = shalt.err (0)
          %s548 = sshll.u32 %s1, 4
          %s549 = int_to_ptr.hbm [resolvable:$true] %s548
          %s550 = sshll.u32 [#allocation3], 4
          %s551 = int_to_ptr.vmem [resolvable:$true] %s550
          %553 = dma.hbm_to_vmem [thread:$0]  %s549, 1024, %s551, %s540
          %s554 = smul.u32 128, 1
          %s555 = sshll.u32 %s554, 4
          %556 = dma.done [#allocation4], %s555
          %s557 = smul.u32 4, 16
          %s558 = smul.u32 %s557, 1
          %s559 = sshll.u32 %s558, 4
          %560 = dma.done %s540, %s559
        $region88: #{tpu_custom_call.1} parent=59 // pred_fallthru
          _
        %v561 = vld [vmem:[#allocation2] sm:$0xff]
        %v562 = vld [vmem:[#allocation2 + $0x8] sm:$0xff]
        %v563 = vld [vmem:[#allocation2 + $0x10] sm:$0xff]
        %v564 = vld [vmem:[#allocation2 + $0x18] sm:$0xff]
        %v565 = vld [vmem:[#allocation2 + $0x20] sm:$0xff]
        %v566 = vld [vmem:[#allocation2 + $0x28] sm:$0xff]
        %v567 = vld [vmem:[#allocation2 + $0x30] sm:$0xff]
        %v568 = vld [vmem:[#allocation2 + $0x38] sm:$0xff]
        %v569 = vld [vmem:[#allocation2 + $0x40] sm:$0xff]
        %v570 = vld [vmem:[#allocation2 + $0x48] sm:$0xff]
        %v571 = vld [vmem:[#allocation2 + $0x50] sm:$0xff]
        %v572 = vld [vmem:[#allocation2 + $0x58] sm:$0xff]
        %v573 = vld [vmem:[#allocation2 + $0x60] sm:$0xff]
        %v574 = vld [vmem:[#allocation2 + $0x68] sm:$0xff]
        %v575 = vld [vmem:[#allocation2 + $0x70] sm:$0xff]
        %v576 = vld [vmem:[#allocation2 + $0x78] sm:$0xff]
        %v577 = vld [vmem:[#allocation3] sm:$0xf]
        %v578 = vld [vmem:[#allocation3 + $0x4] sm:$0xf]
        %v579 = vld [vmem:[#allocation3 + $0x8] sm:$0xf]
        %v580 = vld [vmem:[#allocation3 + $0xc] sm:$0xf]
        %v581 = vld [vmem:[#allocation3 + $0x10] sm:$0xf]
        %v582 = vld [vmem:[#allocation3 + $0x14] sm:$0xf]
        %v583 = vld [vmem:[#allocation3 + $0x18] sm:$0xf]
        %v584 = vld [vmem:[#allocation3 + $0x1c] sm:$0xf]
        %v585 = vld [vmem:[#allocation3 + $0x20] sm:$0xf]
        %v586 = vld [vmem:[#allocation3 + $0x24] sm:$0xf]
        %v587 = vld [vmem:[#allocation3 + $0x28] sm:$0xf]
        %v588 = vld [vmem:[#allocation3 + $0x2c] sm:$0xf]
        %v589 = vld [vmem:[#allocation3 + $0x30] sm:$0xf]
        %v590 = vld [vmem:[#allocation3 + $0x34] sm:$0xf]
        %v591 = vld [vmem:[#allocation3 + $0x38] sm:$0xf]
        %v592 = vld [vmem:[#allocation3 + $0x3c] sm:$0xf]
        %v593 = vpack.c.bf16 %v562, %v561
        %v594 = vpack.c.bf16 %v564, %v563
        %v595 = vpack.c.bf16 %v566, %v565
        %v596 = vpack.c.bf16 %v568, %v567
        %v597 = vpack.c.bf16 %v570, %v569
        %v598 = vpack.c.bf16 %v572, %v571
        %v599 = vpack.c.bf16 %v574, %v573
        %v600 = vpack.c.bf16 %v576, %v575
        %v601 = vld [vmem:[%s435] sm:$0xf]
        %v602 = vld [vmem:[%s435 + $0x4] sm:$0xf]
        %v603 = vld [vmem:[%s435 + $0x8] sm:$0xf]
        %v604 = vld [vmem:[%s435 + $0xc] sm:$0xf]
        %v605 = vld [vmem:[%s435 + $0x10] sm:$0xf]
        %v606 = vld [vmem:[%s435 + $0x14] sm:$0xf]
        %v607 = vld [vmem:[%s435 + $0x18] sm:$0xf]
        %v608 = vld [vmem:[%s435 + $0x1c] sm:$0xf]
        %v609 = vld [vmem:[%s435 + $0x20] sm:$0xf]
        %v610 = vld [vmem:[%s435 + $0x24] sm:$0xf]
        %v611 = vld [vmem:[%s435 + $0x28] sm:$0xf]
        %v612 = vld [vmem:[%s435 + $0x2c] sm:$0xf]
        %v613 = vld [vmem:[%s435 + $0x30] sm:$0xf]
        %v614 = vld [vmem:[%s435 + $0x34] sm:$0xf]
        %v615 = vld [vmem:[%s435 + $0x38] sm:$0xf]
        %v616 = vld [vmem:[%s435 + $0x3c] sm:$0xf]
        %v617 = vunpack.c.l.bf16 %v601
        %v618 = vunpack.c.l.bf16 %v602
        %v619 = vunpack.c.l.bf16 %v603
        %v620 = vunpack.c.l.bf16 %v604
        %v621 = vunpack.c.l.bf16 %v605
        %v622 = vunpack.c.l.bf16 %v606
        %v623 = vunpack.c.l.bf16 %v607
        %v624 = vunpack.c.l.bf16 %v608
        %v625 = vunpack.c.l.bf16 %v609
        %v626 = vunpack.c.l.bf16 %v610
        %v627 = vunpack.c.l.bf16 %v611
        %v628 = vunpack.c.l.bf16 %v612
        %v629 = vunpack.c.l.bf16 %v613
        %v630 = vunpack.c.l.bf16 %v614
        %v631 = vunpack.c.l.bf16 %v615
        %v632 = vunpack.c.l.bf16 %v616
        %v649 = vunpack.c.l.b16 %v577
        %v650 = vunpack.c.l.b16 %v578
        %v651 = vunpack.c.l.b16 %v579
        %v652 = vunpack.c.l.b16 %v580
        %v653 = vunpack.c.l.b16 %v581
        %v654 = vunpack.c.l.b16 %v582
        %v655 = vunpack.c.l.b16 %v583
        %v656 = vunpack.c.l.b16 %v584
        %v657 = vunpack.c.l.b16 %v585
        %v658 = vunpack.c.l.b16 %v586
        %v659 = vunpack.c.l.b16 %v587
        %v660 = vunpack.c.l.b16 %v588
        %v661 = vunpack.c.l.b16 %v589
        %v662 = vunpack.c.l.b16 %v590
        %v663 = vunpack.c.l.b16 %v591
        %v664 = vunpack.c.l.b16 %v592
        %v665 = vpack.c.b16 %v650, %v649
        %v666 = vpack.c.b16 %v652, %v651
        %v667 = vpack.c.b16 %v654, %v653
        %v668 = vpack.c.b16 %v656, %v655
        %v669 = vpack.c.b16 %v658, %v657
        %v670 = vpack.c.b16 %v660, %v659
        %v671 = vpack.c.b16 %v662, %v661
        %v672 = vpack.c.b16 %v664, %v663
        %681 = vmatpush.bf16.msra.mxu0 %v600
        %682 = vmatpush.bf16.msra.mxu0 %v599
        %683 = vmatpush.bf16.msra.mxu0 %v598
        %684 = vmatpush.bf16.msra.mxu0 %v597
        %685 = vmatpush.bf16.msra.mxu0 %v596
        %686 = vmatpush.bf16.msra.mxu0 %v595
        %687 = vmatpush.bf16.msra.mxu0 %v594
        %688 = vmatpush.bf16.msra.mxu0 %v593
        %689 = vmatmul.bf16.gmra.mxu0 %v665
        %v690 = vpop.f32.mrf.mxu0
        %v691 = vadd.f32 %v617, %v690
        %v692 = vpop.f32.mrf.mxu0
        %v693 = vadd.f32 %v618, %v692
        %694 = vmatmul.bf16.gmra.mxu0 %v666
        %v695 = vpop.f32.mrf.mxu0
        %v696 = vadd.f32 %v619, %v695
        %v697 = vpop.f32.mrf.mxu0
        %v698 = vadd.f32 %v620, %v697
        %699 = vmatmul.bf16.gmra.mxu0 %v667
        %v700 = vpop.f32.mrf.mxu0
        %v701 = vadd.f32 %v621, %v700
        %v702 = vpop.f32.mrf.mxu0
        %v703 = vadd.f32 %v622, %v702
        %704 = vmatmul.bf16.gmra.mxu0 %v668
        %v705 = vpop.f32.mrf.mxu0
        %v706 = vadd.f32 %v623, %v705
        %v707 = vpop.f32.mrf.mxu0
        %v708 = vadd.f32 %v624, %v707
        %709 = vmatmul.bf16.gmra.mxu0 %v669
        %v710 = vpop.f32.mrf.mxu0
        %v711 = vadd.f32 %v625, %v710
        %v712 = vpop.f32.mrf.mxu0
        %v713 = vadd.f32 %v626, %v712
        %714 = vmatmul.bf16.gmra.mxu0 %v670
        %v715 = vpop.f32.mrf.mxu0
        %v716 = vadd.f32 %v627, %v715
        %v717 = vpop.f32.mrf.mxu0
        %v718 = vadd.f32 %v628, %v717
        %719 = vmatmul.bf16.gmra.mxu0 %v671
        %v720 = vpop.f32.mrf.mxu0
        %v721 = vadd.f32 %v629, %v720
        %v722 = vpop.f32.mrf.mxu0
        %v723 = vadd.f32 %v630, %v722
        %724 = vmatmul.bf16.gmra.mxu0 %v672
        %v725 = vpop.f32.mrf.mxu0
        %v726 = vadd.f32 %v631, %v725
        %v727 = vpop.f32.mrf.mxu0
        %v728 = vadd.f32 %v632, %v727
        %729 = vdwg.mxu0
        %v730 = vld [vmem:[%s465] sm:$0xff]
        %v731 = vpack.c.bf16 %v693, %v691
        %v732 = vpack.c.bf16 %v698, %v696
        %v733 = vpack.c.bf16 %v703, %v701
        %v734 = vpack.c.bf16 %v708, %v706
        %v735 = vpack.c.bf16 %v713, %v711
        %v736 = vpack.c.bf16 %v718, %v716
        %v737 = vpack.c.bf16 %v723, %v721
        %v738 = vpack.c.bf16 %v728, %v726
        %v739 = vld [vmem:[%s445] sm:$0xf]
        %v740 = vld [vmem:[%s445 + $0x4] sm:$0xf]
        %v741 = vld [vmem:[%s445 + $0x8] sm:$0xf]
        %v742 = vld [vmem:[%s445 + $0xc] sm:$0xf]
        %v743 = vld [vmem:[%s445 + $0x10] sm:$0xf]
        %v744 = vld [vmem:[%s445 + $0x14] sm:$0xf]
        %v745 = vld [vmem:[%s445 + $0x18] sm:$0xf]
        %v746 = vld [vmem:[%s445 + $0x1c] sm:$0xf]
        %v747 = vld [vmem:[%s445 + $0x20] sm:$0xf]
        %v748 = vld [vmem:[%s445 + $0x24] sm:$0xf]
        %v749 = vld [vmem:[%s445 + $0x28] sm:$0xf]
        %v750 = vld [vmem:[%s445 + $0x2c] sm:$0xf]
        %v751 = vld [vmem:[%s445 + $0x30] sm:$0xf]
        %v752 = vld [vmem:[%s445 + $0x34] sm:$0xf]
        %v753 = vld [vmem:[%s445 + $0x38] sm:$0xf]
        %v754 = vld [vmem:[%s445 + $0x3c] sm:$0xf]
        %v755 = vperm.slane %v730, 0
        %v772 = vunpack.c.l.b16 %v739
        %v773 = vunpack.c.l.b16 %v740
        %v774 = vunpack.c.l.b16 %v741
        %v775 = vunpack.c.l.b16 %v742
        %v776 = vunpack.c.l.b16 %v743
        %v777 = vunpack.c.l.b16 %v744
        %v778 = vunpack.c.l.b16 %v745
        %v779 = vunpack.c.l.b16 %v746
        %v780 = vunpack.c.l.b16 %v747
        %v781 = vunpack.c.l.b16 %v748
        %v782 = vunpack.c.l.b16 %v749
        %v783 = vunpack.c.l.b16 %v750
        %v784 = vunpack.c.l.b16 %v751
        %v785 = vunpack.c.l.b16 %v752
        %v786 = vunpack.c.l.b16 %v753
        %v787 = vunpack.c.l.b16 %v754
        %v788 = vpack.c.b16 %v773, %v772
        %v789 = vpack.c.b16 %v775, %v774
        %v790 = vpack.c.b16 %v777, %v776
        %v791 = vpack.c.b16 %v779, %v778
        %v792 = vpack.c.b16 %v781, %v780
        %v793 = vpack.c.b16 %v783, %v782
        %v794 = vpack.c.b16 %v785, %v784
        %v795 = vpack.c.b16 %v787, %v786
        %804 = vmatpush.bf16.msra.mxu0 %v795
        %805 = vmatpush.bf16.msra.mxu0 %v794
        %806 = vmatpush.bf16.msra.mxu0 %v793
        %807 = vmatpush.bf16.msra.mxu0 %v792
        %808 = vmatpush.bf16.msra.mxu0 %v791
        %809 = vmatpush.bf16.msra.mxu0 %v790
        %810 = vmatpush.bf16.msra.mxu0 %v789
        %811 = vmatpush.bf16.msra.mxu0 %v788
        %812 = vmatmul.bf16.gmra.mxu0 %v731
        %v813 = vpop.f32.mrf.mxu0
        %v814 = vadd.f32 %v755, %v813
        %v815 = vpop.f32.mrf.mxu0
        %v816 = vadd.f32 %v755, %v815
        %817 = vmatmul.bf16.gmra.mxu0 %v732
        %v818 = vpop.f32.mrf.mxu0
        %v819 = vadd.f32 %v755, %v818
        %v820 = vpop.f32.mrf.mxu0
        %v821 = vadd.f32 %v755, %v820
        %822 = vmatmul.bf16.gmra.mxu0 %v733
        %v823 = vpop.f32.mrf.mxu0
        %v824 = vadd.f32 %v755, %v823
        %v825 = vpop.f32.mrf.mxu0
        %v826 = vadd.f32 %v755, %v825
        %827 = vmatmul.bf16.gmra.mxu0 %v734
        %v828 = vpop.f32.mrf.mxu0
        %v829 = vadd.f32 %v755, %v828
        %v830 = vpop.f32.mrf.mxu0
        %v831 = vadd.f32 %v755, %v830
        %832 = vmatmul.bf16.gmra.mxu0 %v735
        %v833 = vpop.f32.mrf.mxu0
        %v834 = vadd.f32 %v755, %v833
        %v835 = vpop.f32.mrf.mxu0
        %v836 = vadd.f32 %v755, %v835
        %837 = vmatmul.bf16.gmra.mxu0 %v736
        %v838 = vpop.f32.mrf.mxu0
        %v839 = vadd.f32 %v755, %v838
        %v840 = vpop.f32.mrf.mxu0
        %v841 = vadd.f32 %v755, %v840
        %842 = vmatmul.bf16.gmra.mxu0 %v737
        %v843 = vpop.f32.mrf.mxu0
        %v844 = vadd.f32 %v755, %v843
        %v845 = vpop.f32.mrf.mxu0
        %v846 = vadd.f32 %v755, %v845
        %847 = vmatmul.bf16.gmra.mxu0 %v738
        %v848 = vpop.f32.mrf.mxu0
        %v849 = vadd.f32 %v755, %v848
        %v850 = vpop.f32.mrf.mxu0
        %v851 = vadd.f32 %v755, %v850
        %852 = vdwg.mxu0
        %v853 = vmax.f32 %v814, 0.0
        %v854 = vmax.f32 %v816, 0.0
        %v855 = vmax.f32 %v819, 0.0
        %v856 = vmax.f32 %v821, 0.0
        %v857 = vmax.f32 %v824, 0.0
        %v858 = vmax.f32 %v826, 0.0
        %v859 = vmax.f32 %v829, 0.0
        %v860 = vmax.f32 %v831, 0.0
        %v861 = vmax.f32 %v834, 0.0
        %v862 = vmax.f32 %v836, 0.0
        %v863 = vmax.f32 %v839, 0.0
        %v864 = vmax.f32 %v841, 0.0
        %v865 = vmax.f32 %v844, 0.0
        %v866 = vmax.f32 %v846, 0.0
        %v867 = vmax.f32 %v849, 0.0
        %v868 = vmax.f32 %v851, 0.0
        %v869 = vpack.c.bf16 %v854, %v853
        %v870 = vpack.c.bf16 %v856, %v855
        %v871 = vpack.c.bf16 %v858, %v857
        %v872 = vpack.c.bf16 %v860, %v859
        %v873 = vpack.c.bf16 %v862, %v861
        %v874 = vpack.c.bf16 %v864, %v863
        %v875 = vpack.c.bf16 %v866, %v865
        %v876 = vpack.c.bf16 %v868, %v867
        %v877 = vld [vmem:[%s455] sm:$0xf]
        %v878 = vld [vmem:[%s455 + $0x4] sm:$0xf]
        %v879 = vld [vmem:[%s455 + $0x8] sm:$0xf]
        %v880 = vld [vmem:[%s455 + $0xc] sm:$0xf]
        %v881 = vld [vmem:[%s455 + $0x10] sm:$0xf]
        %v882 = vld [vmem:[%s455 + $0x14] sm:$0xf]
        %v883 = vld [vmem:[%s455 + $0x18] sm:$0xf]
        %v884 = vld [vmem:[%s455 + $0x1c] sm:$0xf]
        %v885 = vld [vmem:[%s455 + $0x20] sm:$0xf]
        %v886 = vld [vmem:[%s455 + $0x24] sm:$0xf]
        %v887 = vld [vmem:[%s455 + $0x28] sm:$0xf]
        %v888 = vld [vmem:[%s455 + $0x2c] sm:$0xf]
        %v889 = vld [vmem:[%s455 + $0x30] sm:$0xf]
        %v890 = vld [vmem:[%s455 + $0x34] sm:$0xf]
        %v891 = vld [vmem:[%s455 + $0x38] sm:$0xf]
        %v892 = vld [vmem:[%s455 + $0x3c] sm:$0xf]
        %v893 = vperm.slane %v730, 1
        %v910 = vunpack.c.l.b16 %v877
        %v911 = vunpack.c.l.b16 %v878
        %v912 = vunpack.c.l.b16 %v879
        %v913 = vunpack.c.l.b16 %v880
        %v914 = vunpack.c.l.b16 %v881
        %v915 = vunpack.c.l.b16 %v882
        %v916 = vunpack.c.l.b16 %v883
        %v917 = vunpack.c.l.b16 %v884
        %v918 = vunpack.c.l.b16 %v885
        %v919 = vunpack.c.l.b16 %v886
        %v920 = vunpack.c.l.b16 %v887
        %v921 = vunpack.c.l.b16 %v888
        %v922 = vunpack.c.l.b16 %v889
        %v923 = vunpack.c.l.b16 %v890
        %v924 = vunpack.c.l.b16 %v891
        %v925 = vunpack.c.l.b16 %v892
        %v926 = vpack.c.b16 %v911, %v910
        %v927 = vpack.c.b16 %v913, %v912
        %v928 = vpack.c.b16 %v915, %v914
        %v929 = vpack.c.b16 %v917, %v916
        %v930 = vpack.c.b16 %v919, %v918
        %v931 = vpack.c.b16 %v921, %v920
        %v932 = vpack.c.b16 %v923, %v922
        %v933 = vpack.c.b16 %v925, %v924
        %942 = vmatpush.bf16.msra.mxu0 %v933
        %943 = vmatpush.bf16.msra.mxu0 %v932
        %944 = vmatpush.bf16.msra.mxu0 %v931
        %945 = vmatpush.bf16.msra.mxu0 %v930
        %946 = vmatpush.bf16.msra.mxu0 %v929
        %947 = vmatpush.bf16.msra.mxu0 %v928
        %948 = vmatpush.bf16.msra.mxu0 %v927
        %949 = vmatpush.bf16.msra.mxu0 %v926
        %950 = vmatmul.bf16.gmra.mxu0 %v869
        %v951 = vpop.f32.mrf.mxu0
        %v952 = vadd.f32 %v893, %v951
        %v953 = vpop.f32.mrf.mxu0
        %v954 = vadd.f32 %v893, %v953
        %955 = vmatmul.bf16.gmra.mxu0 %v870
        %v956 = vpop.f32.mrf.mxu0
        %v957 = vadd.f32 %v893, %v956
        %v958 = vpop.f32.mrf.mxu0
        %v959 = vadd.f32 %v893, %v958
        %960 = vmatmul.bf16.gmra.mxu0 %v871
        %v961 = vpop.f32.mrf.mxu0
        %v962 = vadd.f32 %v893, %v961
        %v963 = vpop.f32.mrf.mxu0
        %v964 = vadd.f32 %v893, %v963
        %965 = vmatmul.bf16.gmra.mxu0 %v872
        %v966 = vpop.f32.mrf.mxu0
        %v967 = vadd.f32 %v893, %v966
        %v968 = vpop.f32.mrf.mxu0
        %v969 = vadd.f32 %v893, %v968
        %970 = vmatmul.bf16.gmra.mxu0 %v873
        %v971 = vpop.f32.mrf.mxu0
        %v972 = vadd.f32 %v893, %v971
        %v973 = vpop.f32.mrf.mxu0
        %v974 = vadd.f32 %v893, %v973
        %975 = vmatmul.bf16.gmra.mxu0 %v874
        %v976 = vpop.f32.mrf.mxu0
        %v977 = vadd.f32 %v893, %v976
        %v978 = vpop.f32.mrf.mxu0
        %v979 = vadd.f32 %v893, %v978
        %980 = vmatmul.bf16.gmra.mxu0 %v875
        %v981 = vpop.f32.mrf.mxu0
        %v982 = vadd.f32 %v893, %v981
        %v983 = vpop.f32.mrf.mxu0
        %v984 = vadd.f32 %v893, %v983
        %985 = vmatmul.bf16.gmra.mxu0 %v876
        %v986 = vpop.f32.mrf.mxu0
        %v987 = vadd.f32 %v893, %v986
        %v988 = vpop.f32.mrf.mxu0
        %v989 = vadd.f32 %v893, %v988
        %990 = vdwg.mxu0
        %v991 = vld [vmem:[%s6] sm:$0x1]
        %992 = vmatpush.msra.mxu0 %v989
        %993 = vmatpush.msra.mxu0 %v987
        %994 = vmatpush.msra.mxu0 %v984
        %995 = vmatpush.msra.mxu0 %v982
        %996 = vmatpush.msra.mxu0 %v979
        %997 = vmatpush.msra.mxu0 %v977
        %998 = vmatpush.msra.mxu0 %v974
        %999 = vmatpush.msra.mxu0 %v972
        %1000 = vmatpush.msra.mxu0 %v969
        %1001 = vmatpush.msra.mxu0 %v967
        %1002 = vmatpush.msra.mxu0 %v964
        %1003 = vmatpush.msra.mxu0 %v962
        %1004 = vmatpush.msra.mxu0 %v959
        %1005 = vmatpush.msra.mxu0 %v957
        %1006 = vmatpush.msra.mxu0 %v954
        %1007 = vmatpush.msra.mxu0 %v952
        %1008 = vmatmul.f32.gmra.mxu0 %v991
        %v1009 = vpop.f32.mrf.mxu0
        %v1010 = vadd.f32 0.0, %v1009
        %1011 = vdwg.mxu0
        %v1012 = vmul.f32 %v952, %v952
        %v1013 = vmul.f32 %v954, %v954
        %v1014 = vmul.f32 %v957, %v957
        %v1015 = vmul.f32 %v959, %v959
        %v1016 = vmul.f32 %v962, %v962
        %v1017 = vmul.f32 %v964, %v964
        %v1018 = vmul.f32 %v967, %v967
        %v1019 = vmul.f32 %v969, %v969
        %v1020 = vmul.f32 %v972, %v972
        %v1021 = vmul.f32 %v974, %v974
        %v1022 = vmul.f32 %v977, %v977
        %v1023 = vmul.f32 %v979, %v979
        %v1024 = vmul.f32 %v982, %v982
        %v1025 = vmul.f32 %v984, %v984
        %v1026 = vmul.f32 %v987, %v987
        %v1027 = vmul.f32 %v989, %v989
        %1028 = vmatpush.msra.mxu0 %v1027
        %1029 = vmatpush.msra.mxu0 %v1026
        %1030 = vmatpush.msra.mxu0 %v1025
        %1031 = vmatpush.msra.mxu0 %v1024
        %1032 = vmatpush.msra.mxu0 %v1023
        %1033 = vmatpush.msra.mxu0 %v1022
        %1034 = vmatpush.msra.mxu0 %v1021
        %1035 = vmatpush.msra.mxu0 %v1020
        %1036 = vmatpush.msra.mxu0 %v1019
        %1037 = vmatpush.msra.mxu0 %v1018
        %1038 = vmatpush.msra.mxu0 %v1017
        %1039 = vmatpush.msra.mxu0 %v1016
        %1040 = vmatpush.msra.mxu0 %v1015
        %1041 = vmatpush.msra.mxu0 %v1014
        %1042 = vmatpush.msra.mxu0 %v1013
        %1043 = vmatpush.msra.mxu0 %v1012
        %1044 = vmatmul.f32.gmra.mxu0 %v991
        %v1045 = vpop.f32.mrf.mxu0
        %v1046 = vadd.f32 0.0, %v1045
        %1047 = vdwg.mxu0
        %v1048 = vmul.f32 %v1010, %v1010
        %v1049 = vsub.f32 %v1046, %v1048
        %v1050 = vmax.f32 %v1049, 0.0
        %v1051 = vadd.f32 %v1050, 1e-05
        %v1052 = vrsqrt.pop %v1051
        %v1053 = vmul.f32 %v1052, %v1051
        %v1054 = vmul.f32 %v1053, %v1052
        %v1055 = vmul.f32 0.5, %v1054
        %v1056 = vsub.f32 1.5, %v1055
        %v1057 = vmul.f32 %v1052, %v1056
        %vm1058 = vweird.f32 %v1051
        %vm1059 = vweird.f32 %v1052
        %vm1060 = vmor %vm1058, %vm1059
        %v1061 = vsel %vm1060, %v1052, %v1057
        %v1063 = vrot.slane %v1061, 6
        %v1065 = vmul.f32 %v730, %v1063
        %v1067 = vrot.slane %v1065, 2
        %v1069 = vmul.f32 %v1010, %v1067
        %v1071 = vrot.slane %v1069, 5
        %v1073 = vsub.f32 %v730, %v1071
        %v1074 = vperm.slane %v1065, 2
        %v1075 = vmul.f32 %v952, %v1074
        %v1076 = vmul.f32 %v954, %v1074
        %v1077 = vmul.f32 %v957, %v1074
        %v1078 = vmul.f32 %v959, %v1074
        %v1079 = vmul.f32 %v962, %v1074
        %v1080 = vmul.f32 %v964, %v1074
        %v1081 = vmul.f32 %v967, %v1074
        %v1082 = vmul.f32 %v969, %v1074
        %v1083 = vmul.f32 %v972, %v1074
        %v1084 = vmul.f32 %v974, %v1074
        %v1085 = vmul.f32 %v977, %v1074
        %v1086 = vmul.f32 %v979, %v1074
        %v1087 = vmul.f32 %v982, %v1074
        %v1088 = vmul.f32 %v984, %v1074
        %v1089 = vmul.f32 %v987, %v1074
        %v1090 = vmul.f32 %v989, %v1074
        %v1091 = vperm.slane %v1073, 3
        %v1092 = vadd.f32 %v1075, %v1091
        %v1093 = vadd.f32 %v1076, %v1091
        %v1094 = vadd.f32 %v1077, %v1091
        %v1095 = vadd.f32 %v1078, %v1091
        %v1096 = vadd.f32 %v1079, %v1091
        %v1097 = vadd.f32 %v1080, %v1091
        %v1098 = vadd.f32 %v1081, %v1091
        %v1099 = vadd.f32 %v1082, %v1091
        %v1100 = vadd.f32 %v1083, %v1091
        %v1101 = vadd.f32 %v1084, %v1091
        %v1102 = vadd.f32 %v1085, %v1091
        %v1103 = vadd.f32 %v1086, %v1091
        %v1104 = vadd.f32 %v1087, %v1091
        %v1105 = vadd.f32 %v1088, %v1091
        %v1106 = vadd.f32 %v1089, %v1091
        %v1107 = vadd.f32 %v1090, %v1091
        %p1108 = scmp.lt.s32.totalorder %s34, 2
        // Predicated region
        $region97: #{tpu_custom_call.1} parent=59 // pred_check
          %p1109 = pneg %p1108
        $region98: #{tpu_custom_call.1} parent=59 // pred_check_branch
          %1111 = sbr.rel (%p1109) target = $region100
        $region99: #{tpu_custom_call.1} parent=59 // pred_region
          %v1112 = vmax.f32 %v1092, 0.0
          %v1113 = vmax.f32 %v1093, 0.0
          %v1114 = vmax.f32 %v1094, 0.0
          %v1115 = vmax.f32 %v1095, 0.0
          %v1116 = vmax.f32 %v1096, 0.0
          %v1117 = vmax.f32 %v1097, 0.0
          %v1118 = vmax.f32 %v1098, 0.0
          %v1119 = vmax.f32 %v1099, 0.0
          %v1120 = vmax.f32 %v1100, 0.0
          %v1121 = vmax.f32 %v1101, 0.0
          %v1122 = vmax.f32 %v1102, 0.0
          %v1123 = vmax.f32 %v1103, 0.0
          %v1124 = vmax.f32 %v1104, 0.0
          %v1125 = vmax.f32 %v1105, 0.0
          %v1126 = vmax.f32 %v1106, 0.0
          %v1127 = vmax.f32 %v1107, 0.0
          %1128 = vst [vmem:[#allocation2] sm:$0xff] %v1112
          %1129 = vst [vmem:[#allocation2 + $0x8] sm:$0xff] %v1113
          %1130 = vst [vmem:[#allocation2 + $0x10] sm:$0xff] %v1114
          %1131 = vst [vmem:[#allocation2 + $0x18] sm:$0xff] %v1115
          %1132 = vst [vmem:[#allocation2 + $0x20] sm:$0xff] %v1116
          %1133 = vst [vmem:[#allocation2 + $0x28] sm:$0xff] %v1117
          %1134 = vst [vmem:[#allocation2 + $0x30] sm:$0xff] %v1118
          %1135 = vst [vmem:[#allocation2 + $0x38] sm:$0xff] %v1119
          %1136 = vst [vmem:[#allocation2 + $0x40] sm:$0xff] %v1120
          %1137 = vst [vmem:[#allocation2 + $0x48] sm:$0xff] %v1121
          %1138 = vst [vmem:[#allocation2 + $0x50] sm:$0xff] %v1122
          %1139 = vst [vmem:[#allocation2 + $0x58] sm:$0xff] %v1123
          %1140 = vst [vmem:[#allocation2 + $0x60] sm:$0xff] %v1124
          %1141 = vst [vmem:[#allocation2 + $0x68] sm:$0xff] %v1125
          %1142 = vst [vmem:[#allocation2 + $0x70] sm:$0xff] %v1126
          %1143 = vst [vmem:[#allocation2 + $0x78] sm:$0xff] %v1127
        $region100: #{tpu_custom_call.1} parent=59 // pred_fallthru
          _
        %p1144 = scmp.eq.s32.totalorder %s34, 2
        // Predicated region
        $region101: #{tpu_custom_call.1} parent=59 // pred_check
          %p1145 = pneg %p1144
        $region102: #{tpu_custom_call.1} parent=59 // pred_check_branch
          %1147 = sbr.rel (%p1145) target = $region104
        $region103: #{tpu_custom_call.1} parent=59 // pred_region
          %v1148 = vld [vmem:[%s7] sm:$0x3]
          %1149 = vmatpush.msra.mxu0 %v1107
          %1150 = vmatpush.msra.mxu0 %v1106
          %1151 = vmatpush.msra.mxu0 %v1105
          %1152 = vmatpush.msra.mxu0 %v1104
          %1153 = vmatpush.msra.mxu0 %v1103
          %1154 = vmatpush.msra.mxu0 %v1102
          %1155 = vmatpush.msra.mxu0 %v1101
          %1156 = vmatpush.msra.mxu0 %v1100
          %1157 = vmatpush.msra.mxu0 %v1099
          %1158 = vmatpush.msra.mxu0 %v1098
          %1159 = vmatpush.msra.mxu0 %v1097
          %1160 = vmatpush.msra.mxu0 %v1096
          %1161 = vmatpush.msra.mxu0 %v1095
          %1162 = vmatpush.msra.mxu0 %v1094
          %1163 = vmatpush.msra.mxu0 %v1093
          %1164 = vmatpush.msra.mxu0 %v1092
          %1165 = vmatmul.f32.gmra.mxu0 %v1148
          %v1166 = vpop.f32.mrf.mxu0
          %v1167 = vadd.f32 0.0, %v1166
          %1168 = vdwg.mxu0
          %v1169 = vpack.c.bf16 %v1167, %v1167
          %v1170 = vld [vmem:[#allocation13] sm:$0xf]
          %v1171 = vld [vmem:[#allocation13 + $0x4] sm:$0xf]
          %v1172 = vld [vmem:[#allocation13 + $0x8] sm:$0xf]
          %v1173 = vld [vmem:[#allocation13 + $0xc] sm:$0xf]
          %v1174 = vld [vmem:[#allocation13 + $0x10] sm:$0xf]
          %v1175 = vld [vmem:[#allocation13 + $0x14] sm:$0xf]
          %v1176 = vld [vmem:[#allocation13 + $0x18] sm:$0xf]
          %v1177 = vld [vmem:[#allocation13 + $0x1c] sm:$0xf]
          %v1178 = vld [vmem:[#allocation13 + $0x20] sm:$0xf]
          %v1179 = vld [vmem:[#allocation13 + $0x24] sm:$0xf]
          %v1180 = vld [vmem:[#allocation13 + $0x28] sm:$0xf]
          %v1181 = vld [vmem:[#allocation13 + $0x2c] sm:$0xf]
          %v1182 = vld [vmem:[#allocation13 + $0x30] sm:$0xf]
          %v1183 = vld [vmem:[#allocation13 + $0x34] sm:$0xf]
          %v1184 = vld [vmem:[#allocation13 + $0x38] sm:$0xf]
          %v1185 = vld [vmem:[#allocation13 + $0x3c] sm:$0xf]
          %v1186 = vld [vmem:[%s9] sm:$0x1]
          %v1188 = vperm.slane %v1186, 0
          %v1206 = vunpack.c.l.b16 %v1170
          %v1207 = vunpack.c.l.b16 %v1171
          %v1208 = vunpack.c.l.b16 %v1172
          %v1209 = vunpack.c.l.b16 %v1173
          %v1210 = vunpack.c.l.b16 %v1174
          %v1211 = vunpack.c.l.b16 %v1175
          %v1212 = vunpack.c.l.b16 %v1176
          %v1213 = vunpack.c.l.b16 %v1177
          %v1214 = vunpack.c.l.b16 %v1178
          %v1215 = vunpack.c.l.b16 %v1179
          %v1216 = vunpack.c.l.b16 %v1180
          %v1217 = vunpack.c.l.b16 %v1181
          %v1218 = vunpack.c.l.b16 %v1182
          %v1219 = vunpack.c.l.b16 %v1183
          %v1220 = vunpack.c.l.b16 %v1184
          %v1221 = vunpack.c.l.b16 %v1185
          %v1222 = vpack.c.b16 %v1207, %v1206
          %v1223 = vpack.c.b16 %v1209, %v1208
          %v1224 = vpack.c.b16 %v1211, %v1210
          %v1225 = vpack.c.b16 %v1213, %v1212
          %v1226 = vpack.c.b16 %v1215, %v1214
          %v1227 = vpack.c.b16 %v1217, %v1216
          %v1228 = vpack.c.b16 %v1219, %v1218
          %v1229 = vpack.c.b16 %v1221, %v1220
          %1238 = vmatpush.bf16.msra.mxu0 %v1229
          %1239 = vmatpush.bf16.msra.mxu0 %v1228
          %1240 = vmatpush.bf16.msra.mxu0 %v1227
          %1241 = vmatpush.bf16.msra.mxu0 %v1226
          %1242 = vmatpush.bf16.msra.mxu0 %v1225
          %1243 = vmatpush.bf16.msra.mxu0 %v1224
          %1244 = vmatpush.bf16.msra.mxu0 %v1223
          %1245 = vmatpush.bf16.msra.mxu0 %v1222
          %1246 = vmatmul.bf16.gmra.mxu0 %v1169
          %v1247 = vpop.f32.mrf.mxu0
          %v1248 = vadd.f32 %v1188, %v1247
          %v1249 = vpop.f32.mrf.mxu0
          %1250 = vdwg.mxu0
          %v1251 = vmax.f32 %v1248, 0.0
          %v1252 = vpack.c.bf16 %v1251, %v1251
          %v1253 = vld [vmem:[#allocation14] sm:$0xf]
          %v1254 = vld [vmem:[#allocation14 + $0x4] sm:$0xf]
          %v1255 = vld [vmem:[#allocation14 + $0x8] sm:$0xf]
          %v1256 = vld [vmem:[#allocation14 + $0xc] sm:$0xf]
          %v1257 = vld [vmem:[#allocation14 + $0x10] sm:$0xf]
          %v1258 = vld [vmem:[#allocation14 + $0x14] sm:$0xf]
          %v1259 = vld [vmem:[#allocation14 + $0x18] sm:$0xf]
          %v1260 = vld [vmem:[#allocation14 + $0x1c] sm:$0xf]
          %v1261 = vld [vmem:[#allocation14 + $0x20] sm:$0xf]
          %v1262 = vld [vmem:[#allocation14 + $0x24] sm:$0xf]
          %v1263 = vld [vmem:[#allocation14 + $0x28] sm:$0xf]
          %v1264 = vld [vmem:[#allocation14 + $0x2c] sm:$0xf]
          %v1265 = vld [vmem:[#allocation14 + $0x30] sm:$0xf]
          %v1266 = vld [vmem:[#allocation14 + $0x34] sm:$0xf]
          %v1267 = vld [vmem:[#allocation14 + $0x38] sm:$0xf]
          %v1268 = vld [vmem:[#allocation14 + $0x3c] sm:$0xf]
          %v1269 = vld [vmem:[%s11] sm:$0x1]
          %v1271 = vperm.slane %v1269, 0
          %v1289 = vunpack.c.l.b16 %v1253
          %v1290 = vunpack.c.l.b16 %v1254
          %v1291 = vunpack.c.l.b16 %v1255
          %v1292 = vunpack.c.l.b16 %v1256
          %v1293 = vunpack.c.l.b16 %v1257
          %v1294 = vunpack.c.l.b16 %v1258
          %v1295 = vunpack.c.l.b16 %v1259
          %v1296 = vunpack.c.l.b16 %v1260
          %v1297 = vunpack.c.l.b16 %v1261
          %v1298 = vunpack.c.l.b16 %v1262
          %v1299 = vunpack.c.l.b16 %v1263
          %v1300 = vunpack.c.l.b16 %v1264
          %v1301 = vunpack.c.l.b16 %v1265
          %v1302 = vunpack.c.l.b16 %v1266
          %v1303 = vunpack.c.l.b16 %v1267
          %v1304 = vunpack.c.l.b16 %v1268
          %v1305 = vpack.c.b16 %v1290, %v1289
          %v1306 = vpack.c.b16 %v1292, %v1291
          %v1307 = vpack.c.b16 %v1294, %v1293
          %v1308 = vpack.c.b16 %v1296, %v1295
          %v1309 = vpack.c.b16 %v1298, %v1297
          %v1310 = vpack.c.b16 %v1300, %v1299
          %v1311 = vpack.c.b16 %v1302, %v1301
          %v1312 = vpack.c.b16 %v1304, %v1303
          %1321 = vmatpush.bf16.msra.mxu0 %v1312
          %1322 = vmatpush.bf16.msra.mxu0 %v1311
          %1323 = vmatpush.bf16.msra.mxu0 %v1310
          %1324 = vmatpush.bf16.msra.mxu0 %v1309
          %1325 = vmatpush.bf16.msra.mxu0 %v1308
          %1326 = vmatpush.bf16.msra.mxu0 %v1307
          %1327 = vmatpush.bf16.msra.mxu0 %v1306
          %1328 = vmatpush.bf16.msra.mxu0 %v1305
          %1329 = vmatmul.bf16.gmra.mxu0 %v1252
          %v1330 = vpop.f32.mrf.mxu0
          %v1331 = vadd.f32 %v1271, %v1330
          %v1332 = vpop.f32.mrf.mxu0
          %1333 = vdwg.mxu0
          %1334 = vst [vmem:[#allocation16] sm:$0x3] %v1331
        $region104: #{tpu_custom_call.1} parent=59 // pred_fallthru
          _
        // Predicated region
        $region105: #{tpu_custom_call.1} parent=59 // pred_check
          %p1335 = pneg %p277
        $region106: #{tpu_custom_call.1} parent=59 // pred_check_branch
          %1337 = sbr.rel (%p1335) target = $region108
        $region107: #{tpu_custom_call.1} parent=59 // pred_region
          %1339 = vsyncadd [#allocation7], 0
          %s1341 = sshll.u32 [#allocation16], 4
          %s1342 = int_to_ptr.vmem [resolvable:$true] %s1341
          %s1343 = sshll.u32 %s12, 4
          %s1344 = int_to_ptr.hbm [resolvable:$true] %s1343
          %1346 = dma.vmem_to_hbm [thread:$0]  %s1342, 32, %s1344, [#allocation7]
        $region108: #{tpu_custom_call.1} parent=59 // pred_fallthru
          _
        // Predicated region
        $region109: #{tpu_custom_call.1} parent=59 // pred_check
          %p1347 = pneg %p277
        $region110: #{tpu_custom_call.1} parent=59 // pred_check_branch
          %1349 = sbr.rel (%p1347) target = $region112
        $region111: #{tpu_custom_call.1} parent=59 // pred_region
          %1351 = dma.done [#allocation7], 32
        $region112: #{tpu_custom_call.1} parent=59 // pred_fallthru
          _
      $region60: #{tpu_custom_call.1} parent=5 // pred_fallthru
        _
      %p1352 = scmp.le.s32.totalorder 2, %s29
      // Predicated region
      $region113: #{tpu_custom_call.1} parent=5 // pred_check
        %p1353 = pneg %p1352
      $region114: #{tpu_custom_call.1} parent=5 // pred_check_branch
        %1355 = sbr.rel (%p1353) target = $region116
      $region115: #{tpu_custom_call.1} parent=5 // pred_region
        %s1356 = ssub.s32 %s29, 2
      $region116: #{tpu_custom_call.1} parent=5 // pred_fallthru
        _
    $region6: #{tpu_custom_call.1} parent=1 // loop_footer
      %s33 = sadd.s32 1, %s29
    $region7: #{tpu_custom_call.1} parent=1 // loop_footer_branch
      %28 = sbr.rel target = $region3
    $region8: #{tpu_custom_call.1} parent=1 // loop_exit
      _
    %1357 = vsyncpa [#allocation6], 1
    %s1358 = scalar_lea.sflag [#allocation6], 1
    %1359 = vsyncpa %s1358, 1
    %1360 = vsyncpa [#allocation9], 1
    %s1361 = scalar_lea.sflag [#allocation9], 1
    %1362 = vsyncpa %s1361, 1
    %1363 = vsyncpa [#allocation12], 1
    %s1364 = scalar_lea.sflag [#allocation12], 1
    %1365 = vsyncpa %s1364, 1
    %1366 = vsyncpa [#allocation15], 1
    %1367 = vsyncpa [#allocation7], 1
    %s1368 = scalar_lea.sflag [#allocation7], 1
    %1369 = vsyncpa %s1368, 1
  %1370 = vsyncmov [#allocation4]
  %s1371 = vpop.sfrf %1370
  %p1372 = scmp.eq.s32.totalorder %s1371, 0
  %p1373 = pneg %p1372
  %1375 = shalt.err (%p1373)
  %s1376 = scalar_lea.sflag [#allocation4], 1
  %1377 = vsyncmov %s1376
  %s1378 = vpop.sfrf %1377
  %p1379 = scmp.eq.s32.totalorder %s1378, 0
  %p1380 = pneg %p1379
  %1382 = shalt.err (%p1380)

</llo_original>
